<compile_context>
chip_gen: v7x
topology: tpu7x:2x2x1
jax: 0.10.0
libtpu: 0.0.40
codegen_flags: <defaults>
</compile_context>

<pallas_src>
import functools

import jax
import jax.numpy as jnp
from jax.experimental import pallas as pl
from jax.experimental.pallas import tpu as pltpu

STATE_DIM = 32
ANNOTATION_DIM = 8
N_EDGE_TYPES = 2
N_NODE = 8
N_STEPS = 4
BATCH = 2

_LANES = 128


def pack_params(params, state_dim, annotation_dim, n_edge_types):
    """Pack all weights into ONE pre-transposed bf16 slab + ONE f32 (8,128) bias tile.

    Called once at parameter-init time (hoisted out of the per-forward path).
    Row offsets are multiples of 16 so bf16 sublane packing stays aligned.
    Returns (slab_bf16, bias_f32, offsets).
    """
    S, A, E = state_dim, annotation_dim, n_edge_types
    # Structural lane constraints (replaces the previously vacuous assert).
    assert 2 * E * S <= _LANES, "fused edge-transform block must fit 128 lanes"
    assert 3 * S <= _LANES, "lane-fused [Wr.T|Wz.T|Wh.T] block must fit 128 lanes"
    assert 4 * S <= _LANES, "co-packed bias row [br|bz|bh|bo1] must fit 128 lanes"
    assert S + A <= _LANES and S + 1 <= _LANES

    f32 = jnp.float32
    blocks, off, cur = [], {}, 0

    def add(name, mat):
        nonlocal cur
        mat = jnp.asarray(mat, f32)
        r, c = mat.shape
        rp = ((r + 15) // 16) * 16
        blocks.append(jnp.zeros((rp, _LANES), f32).at[:r, :c].set(mat))
        off[name] = cur
        cur += rp

    # fused, pre-transposed per-edge-type transforms: [Win0.T | Win1.T | Wout0.T | Wout1.T]
    add("w_edge", jnp.concatenate([params["w_in"][e].T for e in range(E)]
                                  + [params["w_out"][e].T for e in range(E)], axis=1))
    # fused GRU gate weights, lane-co-packed: [Wr.T | Wz.T | Wh.T]   -> (3S, 4S)
    add("w_rzh", jnp.concatenate([params["wr"].T, params["wz"].T, params["wh"].T], axis=1))
    # readout: Wo1.T (S+A, S) with Wo2.T (S, 1) folded into spare lane column S
    w_o12 = jnp.zeros((S + A, S + 1), f32)
    w_o12 = w_o12.at[:, :S].set(params["wo1"].T)
    w_o12 = w_o12.at[:S, S:S + 1].set(params["wo2"].T)
    add("w_o12", w_o12)

    slab = jnp.concatenate(blocks, axis=0).astype(jnp.bfloat16)

    # all six bias vectors co-packed into a single f32 (8,128) tile (kept f32: added post-MXU)
    bias = jnp.zeros((8, _LANES), f32)
    b_edge = jnp.concatenate([params["b_in"][e] for e in range(E)]
                             + [params["b_out"][e] for e in range(E)], axis=1)
    bias = bias.at[0:1, :2 * E * S].set(b_edge)
    bias = bias.at[1:2, 0:S].set(params["br"])
    bias = bias.at[1:2, S:2 * S].set(params["bz"])
    bias = bias.at[1:2, 2 * S:3 * S].set(params["bh"])
    bias = bias.at[1:2, 3 * S:4 * S].set(params["bo1"])
    bias = bias.at[2:3, 0:1].set(params["bo2"])
    return slab, bias, off


def _ggnn_kernel(prop_ref, ann_ref, bd_ref, slab_ref, bias_ref, out_ref, *,
                 n_steps, state_dim, ann_dim, n_edge_types, bn, off):
    f32, bf16 = jnp.float32, jnp.bfloat16
    S, A, E, BN = state_dim, ann_dim, n_edge_types, bn

    def mm(x, w):  # bf16 operands, f32 accumulation (single-pass MXU)
        return jnp.dot(x.astype(bf16), w, preferred_element_type=f32)

    # ---- static weight slices (pre-transposed bf16), hoisted out of the step loop ----
    w_edge = slab_ref[off["w_edge"]:off["w_edge"] + S, :2 * E * S]          # (S, 2ES)
    w_rzh = slab_ref[off["w_rzh"]:off["w_rzh"] + 3 * S, :3 * S]             # (3S, 3S)
    w_rz, w_h = w_rzh[:, :2 * S], w_rzh[:, 2 * S:3 * S]                     # (3S,2S),(3S,S)
    w_o12 = slab_ref[off["w_o12"]:off["w_o12"] + S + A, :S + 1]             # (S+A, S+1)
    w_o1, w_o2 = w_o12[:, :S], w_o12[:S, S:S + 1]                           # (S+A,S),(S,1)

    # ---- biases (f32): broadcast ONCE outside the unrolled step loop ----
    b_all = bias_ref[...]                                                   # (8, 128)
    b_edge = jnp.broadcast_to(b_all[0:1, :2 * E * S], (BN, 2 * E * S))
    b_rz = jnp.broadcast_to(b_all[1:2, :2 * S], (BN, 2 * S))
    b_h = jnp.broadcast_to(b_all[1:2, 2 * S:3 * S], (BN, S))
    b_o1 = jnp.broadcast_to(b_all[1:2, 3 * S:4 * S], (BN, S))
    b_o2 = b_all[2:3, 0:1]                                                  # (1, 1)

    # ---- block-diagonal-by-batch adjacency (built host-side), slices hoisted ----
    bd = bd_ref[...]                                                        # (2E*BN, BN) bf16
    bd_in = [bd[e * BN:(e + 1) * BN, :] for e in range(E)]
    bd_out = [bd[(E + e) * BN:(E + e + 1) * BN, :] for e in range(E)]

    prop = prop_ref[...]                                                    # (BN, S) f32 state

    for _ in range(n_steps):
        # all 2E edge-type Linear layers fused into ONE lane-dense (S, 2ES) matmul
        edge_all = mm(prop, w_edge) + b_edge                                # (BN, 2ES) f32
        edge_b = edge_all.astype(bf16)

        # adjacency contraction: 4 independent (BN,BN)@(BN,S) matmuls (no sublane concats)
        a_in = mm(bd_in[0], edge_b[:, :S])
        a_out = mm(bd_out[0], edge_b[:, E * S:(E + 1) * S])
        for e in range(1, E):
            a_in = a_in + mm(bd_in[e], edge_b[:, e * S:(e + 1) * S])
            a_out = a_out + mm(bd_out[e], edge_b[:, (E + e) * S:(E + e + 1) * S])

        # GRU gates: cheap in-vreg lane concat + ONE fused matmul each
        a_cat = jnp.concatenate([a_in, a_out, prop], axis=1)                # (BN, 3S)
        rz = jax.nn.sigmoid(mm(a_cat, w_rz) + b_rz)                         # (BN, 2S)
        r, z = rz[:, :S], rz[:, S:2 * S]
        j_cat = jnp.concatenate([a_in, a_out, r * prop], axis=1)            # (BN, 3S)
        h_hat = jnp.tanh(mm(j_cat, w_h) + b_h)                              # (BN, S)
        prop = (1.0 - z) * prop + z * h_hat                                 # f32 state carry

    # SelectNode readout: one fused [prop|ann] matmul -> tanh -> tiny matvec
    join = jnp.concatenate([prop, ann_ref[...]], axis=1)                    # (BN, S+A)
    h = jnp.tanh(mm(join, w_o1) + b_o1)                                     # (BN, S)
    # TODO(synk): (BN,1) store is a masked 1-lane vst; negligible at BN=16 (perf review #9).
    out_ref[...] = mm(h, w_o2) + b_o2                                       # (BN, 1)


def make_ggnn_forward(params, n_steps=N_STEPS):
    """Pack parameters ONCE; return a jitted forward(prop_state, annotation, A)."""
    E, S, _ = params["w_in"].shape
    A_dim = params["wo1"].shape[1] - S
    slab, bias, off = pack_params(params, S, A_dim, E)

    @jax.jit
    def forward(prop_state, annotation, adj):
        B, N, _ = prop_state.shape
        BN = B * N
        NE = N * E
        prop2 = prop_state.reshape(BN, S).astype(jnp.float32)
        ann2 = annotation.reshape(BN, A_dim).astype(jnp.float32)

        # Block-diagonal-by-batch adjacency: one (BN, BN) block per (direction, edge type),
        # sublane-stacked so in-kernel slices land on 16-row-aligned offsets.
        bd = jnp.zeros((2 * E * BN, BN), jnp.float32)
        for e in range(E):
            for b in range(B):
                r_in = e * BN + b * N
                r_out = (E + e) * BN + b * N
                c = b * N
                bd = bd.at[r_in:r_in + N, c:c + N].set(adj[b, :, e * N:(e + 1) * N])
                bd = bd.at[r_out:r_out + N, c:c + N].set(adj[b, :, NE + e * N:NE + (e + 1) * N])
        bd = bd.astype(jnp.bfloat16)

        kernel = functools.partial(
            _ggnn_kernel, n_steps=n_steps, state_dim=S, ann_dim=A_dim,
            n_edge_types=E, bn=BN, off=off)

        # Single invocation, whole problem resident in VMEM (<0.2 MiB): no grid, no tiling.
        out = pl.pallas_call(
            kernel,
            out_shape=jax.ShapeDtypeStruct((BN, 1), jnp.float32),
            in_specs=[pl.BlockSpec(memory_space=pltpu.MemorySpace.VMEM)] * 5,
            out_specs=pl.BlockSpec(memory_space=pltpu.MemorySpace.VMEM),
        )(prop2, ann2, bd, slab, bias)
        return out.reshape(B, N)

    return forward


def make_params(key, state_dim, annotation_dim, n_edge_types):
    ks = jax.random.split(key, 7)
    std = 0.02
    z = lambda *s: jnp.zeros(s, jnp.float32)
    n = lambda k, *s: std * jax.random.normal(k, s, jnp.float32)
    return {
        "w_in": n(ks[0], n_edge_types, state_dim, state_dim),
        "b_in": z(n_edge_types, 1, state_dim),
        "w_out": n(ks[1], n_edge_types, state_dim, state_dim),
        "b_out": z(n_edge_types, 1, state_dim),
        "wr": n(ks[2], state_dim, 3 * state_dim), "br": z(1, state_dim),
        "wz": n(ks[3], state_dim, 3 * state_dim), "bz": z(1, state_dim),
        "wh": n(ks[4], state_dim, 3 * state_dim), "bh": z(1, state_dim),
        "wo1": n(ks[5], state_dim, state_dim + annotation_dim), "bo1": z(1, state_dim),
        "wo2": n(ks[6], 1, state_dim), "bo2": z(1, 1),
    }


def ggnn_reference(prop_state, annotation, A, params):
    """Pure-JAX mirror of the PyTorch forward pass (HIGHEST precision), for checking."""
    n_node = prop_state.shape[1]
    ne = n_node * N_EDGE_TYPES
    hp = lambda a, b: jnp.matmul(a, b, precision=jax.lax.Precision.HIGHEST)
    prop = prop_state
    for _ in range(N_STEPS):
        ins = [hp(prop, params["w_in"][e].T) + params["b_in"][e] for e in range(N_EDGE_TYPES)]
        outs = [hp(prop, params["w_out"][e].T) + params["b_out"][e] for e in range(N_EDGE_TYPES)]
        in_states = jnp.concatenate(ins, axis=1)    # (B, E*N, S) edge-major
        out_states = jnp.concatenate(outs, axis=1)
        a_in = hp(A[:, :, :ne], in_states)
        a_out = hp(A[:, :, ne:], out_states)
        a = jnp.concatenate([a_in, a_out, prop], axis=2)
        r = jax.nn.sigmoid(hp(a, params["wr"].T) + params["br"])
        z = jax.nn.sigmoid(hp(a, params["wz"].T) + params["bz"])
        joined = jnp.concatenate([a_in, a_out, r * prop], axis=2)
        h_hat = jnp.tanh(hp(joined, params["wh"].T) + params["bh"])
        prop = (1.0 - z) * prop + z * h_hat
    join = jnp.concatenate([prop, annotation], axis=2)
    h = jnp.tanh(hp(join, params["wo1"].T) + params["bo1"])
    score = hp(h, params["wo2"].T) + params["bo2"]
    return jnp.sum(score, axis=2)


if __name__ == "__main__":
    key = jax.random.PRNGKey(0)
    k_ann, k_adj, k_param = jax.random.split(key, 3)

    annotation = jax.random.normal(k_ann, (BATCH, N_NODE, ANNOTATION_DIM), jnp.float32)
    pad = jnp.zeros((BATCH, N_NODE, STATE_DIM - ANNOTATION_DIM), jnp.float32)
    prop_state = jnp.concatenate([annotation, pad], axis=2)   # standard GGNN init
    A = jax.random.uniform(k_adj, (BATCH, N_NODE, 2 * N_NODE * N_EDGE_TYPES), jnp.float32)
    params = make_params(k_param, STATE_DIM, ANNOTATION_DIM, N_EDGE_TYPES)

    ggnn_forward = make_ggnn_forward(params)   # parameters packed once, forward jitted once
    out = jax.block_until_ready(ggnn_forward(prop_state, annotation, A))
    ref = ggnn_reference(prop_state, annotation, A, params)

    assert out.shape == (BATCH, N_NODE), out.shape
    # Kernel runs bf16 MXU operands (f32 accumulation); reference is HIGHEST-precision f32,
    # so tolerances are set to bf16-operand level.
    assert jnp.allclose(out, ref, rtol=2e-2, atol=2e-3), \
        f"max abs diff = {float(jnp.max(jnp.abs(out - ref)))}"
    print("KERNEL_OK")
</pallas_src>

<mosaic_0001>
module attributes {stable_mosaic.version = 11 : i64} {
  func.func @_ggnn_kernel(%arg0: memref<16x32xf32, #tpu.memory_space<vmem>>, %arg1: memref<16x8xf32, #tpu.memory_space<vmem>>, %arg2: memref<64x16xbf16, #tpu.memory_space<vmem>>, %arg3: memref<176x128xbf16, #tpu.memory_space<vmem>>, %arg4: memref<8x128xf32, #tpu.memory_space<vmem>>, %arg5: memref<16x1xf32, #tpu.memory_space<vmem>>) attributes {dimension_semantics = [], scalar_prefetch = 0 : i64, scratch_operands = 0 : i64, tpu.core_type = #tpu.core_type<tc>} {
    %c0 = arith.constant 0 : index
    %c0_0 = arith.constant 0 : index
    %0 = vector.load %arg3[%c0, %c0_0] : memref<176x128xbf16, #tpu.memory_space<vmem>>, vector<32x128xbf16>
    %c32 = arith.constant 32 : index
    %c0_1 = arith.constant 0 : index
    %1 = vector.load %arg3[%c32, %c0_1] : memref<176x128xbf16, #tpu.memory_space<vmem>>, vector<96x96xbf16>
    %2 = vector.extract_strided_slice %1 {offsets = [0, 0], sizes = [96, 64], strides = [1, 1]} : vector<96x96xbf16> to vector<96x64xbf16>
    %3 = vector.extract_strided_slice %1 {offsets = [0, 64], sizes = [96, 32], strides = [1, 1]} : vector<96x96xbf16> to vector<96x32xbf16>
    %c128 = arith.constant 128 : index
    %c0_2 = arith.constant 0 : index
    %4 = vector.load %arg3[%c128, %c0_2] : memref<176x128xbf16, #tpu.memory_space<vmem>>, vector<40x33xbf16>
    %5 = vector.extract_strided_slice %4 {offsets = [0, 0], sizes = [40, 32], strides = [1, 1]} : vector<40x33xbf16> to vector<40x32xbf16>
    %6 = vector.extract_strided_slice %4 {offsets = [0, 32], sizes = [32, 1], strides = [1, 1]} : vector<40x33xbf16> to vector<32x1xbf16>
    %c0_3 = arith.constant 0 : index
    %c0_4 = arith.constant 0 : index
    %7 = vector.load %arg4[%c0_3, %c0_4] : memref<8x128xf32, #tpu.memory_space<vmem>>, vector<8x128xf32>
    %8 = vector.extract_strided_slice %7 {offsets = [0, 0], sizes = [1, 128], strides = [1, 1]} : vector<8x128xf32> to vector<1x128xf32>
    %9 = vector.shape_cast %8 : vector<1x128xf32> to vector<1x128xf32>
    %10 = vector.broadcast %9 : vector<1x128xf32> to vector<16x128xf32>
    %11 = vector.extract_strided_slice %7 {offsets = [1, 0], sizes = [1, 64], strides = [1, 1]} : vector<8x128xf32> to vector<1x64xf32>
    %12 = vector.shape_cast %11 : vector<1x64xf32> to vector<1x64xf32>
    %13 = vector.broadcast %12 : vector<1x64xf32> to vector<16x64xf32>
    %14 = vector.extract_strided_slice %7 {offsets = [1, 64], sizes = [1, 32], strides = [1, 1]} : vector<8x128xf32> to vector<1x32xf32>
    %15 = vector.shape_cast %14 : vector<1x32xf32> to vector<1x32xf32>
    %16 = vector.broadcast %15 : vector<1x32xf32> to vector<16x32xf32>
    %17 = vector.extract_strided_slice %7 {offsets = [1, 96], sizes = [1, 32], strides = [1, 1]} : vector<8x128xf32> to vector<1x32xf32>
    %18 = vector.shape_cast %17 : vector<1x32xf32> to vector<1x32xf32>
    %19 = vector.broadcast %18 : vector<1x32xf32> to vector<16x32xf32>
    %20 = vector.extract_strided_slice %7 {offsets = [2, 0], sizes = [1, 1], strides = [1, 1]} : vector<8x128xf32> to vector<1x1xf32>
    %c0_5 = arith.constant 0 : index
    %c0_6 = arith.constant 0 : index
    %21 = vector.load %arg2[%c0_5, %c0_6] : memref<64x16xbf16, #tpu.memory_space<vmem>>, vector<64x16xbf16>
    %22 = vector.extract_strided_slice %21 {offsets = [0, 0], sizes = [16, 16], strides = [1, 1]} : vector<64x16xbf16> to vector<16x16xbf16>
    %23 = vector.extract_strided_slice %21 {offsets = [16, 0], sizes = [16, 16], strides = [1, 1]} : vector<64x16xbf16> to vector<16x16xbf16>
    %24 = vector.extract_strided_slice %21 {offsets = [32, 0], sizes = [16, 16], strides = [1, 1]} : vector<64x16xbf16> to vector<16x16xbf16>
    %25 = vector.extract_strided_slice %21 {offsets = [48, 0], sizes = [16, 16], strides = [1, 1]} : vector<64x16xbf16> to vector<16x16xbf16>
    %c0_7 = arith.constant 0 : index
    %c0_8 = arith.constant 0 : index
    %26 = vector.load %arg0[%c0_7, %c0_8] : memref<16x32xf32, #tpu.memory_space<vmem>>, vector<16x32xf32>
    %27 = arith.truncf %26 : vector<16x32xf32> to vector<16x32xbf16>
    %cst = arith.constant dense<0.000000e+00> : vector<16x128xf32>
    %28 = tpu.matmul %27, %0, %cst {dimension_numbers = #tpu.dot_dimension_numbers<[1], [0], [0], [1], [0, 0, 1, 1], [], []>} : vector<16x32xbf16>, vector<32x128xbf16>, vector<16x128xf32> -> vector<16x128xf32>
    %29 = arith.addf %28, %10 : vector<16x128xf32>
    %30 = arith.truncf %29 : vector<16x128xf32> to vector<16x128xbf16>
    %31 = vector.extract_strided_slice %30 {offsets = [0, 0], sizes = [16, 32], strides = [1, 1]} : vector<16x128xbf16> to vector<16x32xbf16>
    %cst_9 = arith.constant dense<0.000000e+00> : vector<16x32xf32>
    %32 = tpu.matmul %22, %31, %cst_9 {dimension_numbers = #tpu.dot_dimension_numbers<[1], [0], [0], [1], [0, 0, 1, 1], [], []>} : vector<16x16xbf16>, vector<16x32xbf16>, vector<16x32xf32> -> vector<16x32xf32>
    %33 = vector.extract_strided_slice %30 {offsets = [0, 64], sizes = [16, 32], strides = [1, 1]} : vector<16x128xbf16> to vector<16x32xbf16>
    %cst_10 = arith.constant dense<0.000000e+00> : vector<16x32xf32>
    %34 = tpu.matmul %24, %33, %cst_10 {dimension_numbers = #tpu.dot_dimension_numbers<[1], [0], [0], [1], [0, 0, 1, 1], [], []>} : vector<16x16xbf16>, vector<16x32xbf16>, vector<16x32xf32> -> vector<16x32xf32>
    %35 = vector.extract_strided_slice %30 {offsets = [0, 32], sizes = [16, 32], strides = [1, 1]} : vector<16x128xbf16> to vector<16x32xbf16>
    %cst_11 = arith.constant dense<0.000000e+00> : vector<16x32xf32>
    %36 = tpu.matmul %23, %35, %cst_11 {dimension_numbers = #tpu.dot_dimension_numbers<[1], [0], [0], [1], [0, 0, 1, 1], [], []>} : vector<16x16xbf16>, vector<16x32xbf16>, vector<16x32xf32> -> vector<16x32xf32>
    %37 = arith.addf %32, %36 : vector<16x32xf32>
    %38 = vector.extract_strided_slice %30 {offsets = [0, 96], sizes = [16, 32], strides = [1, 1]} : vector<16x128xbf16> to vector<16x32xbf16>
    %cst_12 = arith.constant dense<0.000000e+00> : vector<16x32xf32>
    %39 = tpu.matmul %25, %38, %cst_12 {dimension_numbers = #tpu.dot_dimension_numbers<[1], [0], [0], [1], [0, 0, 1, 1], [], []>} : vector<16x16xbf16>, vector<16x32xbf16>, vector<16x32xf32> -> vector<16x32xf32>
    %40 = arith.addf %34, %39 : vector<16x32xf32>
    %41 = tpu.concatenate %37, %40, %26 in 1 : vector<16x32xf32>, vector<16x32xf32>, vector<16x32xf32> -> vector<16x96xf32>
    %42 = arith.truncf %41 : vector<16x96xf32> to vector<16x96xbf16>
    %cst_13 = arith.constant dense<0.000000e+00> : vector<16x64xf32>
    %43 = tpu.matmul %42, %2, %cst_13 {dimension_numbers = #tpu.dot_dimension_numbers<[1], [0], [0], [1], [0, 0, 1, 1], [], []>} : vector<16x96xbf16>, vector<96x64xbf16>, vector<16x64xf32> -> vector<16x64xf32>
    %44 = arith.addf %43, %13 : vector<16x64xf32>
    %45 = arith.negf %44 : vector<16x64xf32>
    %46 = math.exp %45 : vector<16x64xf32>
    %cst_14 = arith.constant 1.000000e+00 : f32
    %47 = vector.broadcast %cst_14 : f32 to vector<16x64xf32>
    %48 = arith.addf %47, %46 : vector<16x64xf32>
    %49 = arith.divf %47, %48 : vector<16x64xf32>
    %50 = vector.extract_strided_slice %49 {offsets = [0, 0], sizes = [16, 32], strides = [1, 1]} : vector<16x64xf32> to vector<16x32xf32>
    %51 = vector.extract_strided_slice %49 {offsets = [0, 32], sizes = [16, 32], strides = [1, 1]} : vector<16x64xf32> to vector<16x32xf32>
    %52 = arith.mulf %50, %26 : vector<16x32xf32>
    %53 = tpu.concatenate %37, %40, %52 in 1 : vector<16x32xf32>, vector<16x32xf32>, vector<16x32xf32> -> vector<16x96xf32>
    %54 = arith.truncf %53 : vector<16x96xf32> to vector<16x96xbf16>
    %cst_15 = arith.constant dense<0.000000e+00> : vector<16x32xf32>
    %55 = tpu.matmul %54, %3, %cst_15 {dimension_numbers = #tpu.dot_dimension_numbers<[1], [0], [0], [1], [0, 0, 1, 1], [], []>} : vector<16x96xbf16>, vector<96x32xbf16>, vector<16x32xf32> -> vector<16x32xf32>
    %56 = arith.addf %55, %16 : vector<16x32xf32>
    %57 = math.tanh %56 : vector<16x32xf32>
    %cst_16 = arith.constant 1.000000e+00 : f32
    %58 = vector.broadcast %cst_16 : f32 to vector<16x32xf32>
    %59 = arith.subf %58, %51 : vector<16x32xf32>
    %60 = arith.mulf %59, %26 : vector<16x32xf32>
    %61 = arith.mulf %51, %57 : vector<16x32xf32>
    %62 = arith.addf %60, %61 : vector<16x32xf32>
    %63 = arith.truncf %62 : vector<16x32xf32> to vector<16x32xbf16>
    %cst_17 = arith.constant dense<0.000000e+00> : vector<16x128xf32>
    %64 = tpu.matmul %63, %0, %cst_17 {dimension_numbers = #tpu.dot_dimension_numbers<[1], [0], [0], [1], [0, 0, 1, 1], [], []>} : vector<16x32xbf16>, vector<32x128xbf16>, vector<16x128xf32> -> vector<16x128xf32>
    %65 = arith.addf %64, %10 : vector<16x128xf32>
    %66 = arith.truncf %65 : vector<16x128xf32> to vector<16x128xbf16>
    %67 = vector.extract_strided_slice %66 {offsets = [0, 0], sizes = [16, 32], strides = [1, 1]} : vector<16x128xbf16> to vector<16x32xbf16>
    %cst_18 = arith.constant dense<0.000000e+00> : vector<16x32xf32>
    %68 = tpu.matmul %22, %67, %cst_18 {dimension_numbers = #tpu.dot_dimension_numbers<[1], [0], [0], [1], [0, 0, 1, 1], [], []>} : vector<16x16xbf16>, vector<16x32xbf16>, vector<16x32xf32> -> vector<16x32xf32>
    %69 = vector.extract_strided_slice %66 {offsets = [0, 64], sizes = [16, 32], strides = [1, 1]} : vector<16x128xbf16> to vector<16x32xbf16>
    %cst_19 = arith.constant dense<0.000000e+00> : vector<16x32xf32>
    %70 = tpu.matmul %24, %69, %cst_19 {dimension_numbers = #tpu.dot_dimension_numbers<[1], [0], [0], [1], [0, 0, 1, 1], [], []>} : vector<16x16xbf16>, vector<16x32xbf16>, vector<16x32xf32> -> vector<16x32xf32>
    %71 = vector.extract_strided_slice %66 {offsets = [0, 32], sizes = [16, 32], strides = [1, 1]} : vector<16x128xbf16> to vector<16x32xbf16>
    %cst_20 = arith.constant dense<0.000000e+00> : vector<16x32xf32>
    %72 = tpu.matmul %23, %71, %cst_20 {dimension_numbers = #tpu.dot_dimension_numbers<[1], [0], [0], [1], [0, 0, 1, 1], [], []>} : vector<16x16xbf16>, vector<16x32xbf16>, vector<16x32xf32> -> vector<16x32xf32>
    %73 = arith.addf %68, %72 : vector<16x32xf32>
    %74 = vector.extract_strided_slice %66 {offsets = [0, 96], sizes = [16, 32], strides = [1, 1]} : vector<16x128xbf16> to vector<16x32xbf16>
    %cst_21 = arith.constant dense<0.000000e+00> : vector<16x32xf32>
    %75 = tpu.matmul %25, %74, %cst_21 {dimension_numbers = #tpu.dot_dimension_numbers<[1], [0], [0], [1], [0, 0, 1, 1], [], []>} : vector<16x16xbf16>, vector<16x32xbf16>, vector<16x32xf32> -> vector<16x32xf32>
    %76 = arith.addf %70, %75 : vector<16x32xf32>
    %77 = tpu.concatenate %73, %76, %62 in 1 : vector<16x32xf32>, vector<16x32xf32>, vector<16x32xf32> -> vector<16x96xf32>
    %78 = arith.truncf %77 : vector<16x96xf32> to vector<16x96xbf16>
    %cst_22 = arith.constant dense<0.000000e+00> : vector<16x64xf32>
    %79 = tpu.matmul %78, %2, %cst_22 {dimension_numbers = #tpu.dot_dimension_numbers<[1], [0], [0], [1], [0, 0, 1, 1], [], []>} : vector<16x96xbf16>, vector<96x64xbf16>, vector<16x64xf32> -> vector<16x64xf32>
    %80 = arith.addf %79, %13 : vector<16x64xf32>
    %81 = arith.negf %80 : vector<16x64xf32>
    %82 = math.exp %81 : vector<16x64xf32>
    %cst_23 = arith.constant 1.000000e+00 : f32
    %83 = vector.broadcast %cst_23 : f32 to vector<16x64xf32>
    %84 = arith.addf %83, %82 : vector<16x64xf32>
    %85 = arith.divf %83, %84 : vector<16x64xf32>
    %86 = vector.extract_strided_slice %85 {offsets = [0, 0], sizes = [16, 32], strides = [1, 1]} : vector<16x64xf32> to vector<16x32xf32>
    %87 = vector.extract_strided_slice %85 {offsets = [0, 32], sizes = [16, 32], strides = [1, 1]} : vector<16x64xf32> to vector<16x32xf32>
    %88 = arith.mulf %86, %62 : vector<16x32xf32>
    %89 = tpu.concatenate %73, %76, %88 in 1 : vector<16x32xf32>, vector<16x32xf32>, vector<16x32xf32> -> vector<16x96xf32>
    %90 = arith.truncf %89 : vector<16x96xf32> to vector<16x96xbf16>
    %cst_24 = arith.constant dense<0.000000e+00> : vector<16x32xf32>
    %91 = tpu.matmul %90, %3, %cst_24 {dimension_numbers = #tpu.dot_dimension_numbers<[1], [0], [0], [1], [0, 0, 1, 1], [], []>} : vector<16x96xbf16>, vector<96x32xbf16>, vector<16x32xf32> -> vector<16x32xf32>
    %92 = arith.addf %91, %16 : vector<16x32xf32>
    %93 = math.tanh %92 : vector<16x32xf32>
    %cst_25 = arith.constant 1.000000e+00 : f32
    %94 = vector.broadcast %cst_25 : f32 to vector<16x32xf32>
    %95 = arith.subf %94, %87 : vector<16x32xf32>
    %96 = arith.mulf %95, %62 : vector<16x32xf32>
    %97 = arith.mulf %87, %93 : vector<16x32xf32>
    %98 = arith.addf %96, %97 : vector<16x32xf32>
    %99 = arith.truncf %98 : vector<16x32xf32> to vector<16x32xbf16>
    %cst_26 = arith.constant dense<0.000000e+00> : vector<16x128xf32>
    %100 = tpu.matmul %99, %0, %cst_26 {dimension_numbers = #tpu.dot_dimension_numbers<[1], [0], [0], [1], [0, 0, 1, 1], [], []>} : vector<16x32xbf16>, vector<32x128xbf16>, vector<16x128xf32> -> vector<16x128xf32>
    %101 = arith.addf %100, %10 : vector<16x128xf32>
    %102 = arith.truncf %101 : vector<16x128xf32> to vector<16x128xbf16>
    %103 = vector.extract_strided_slice %102 {offsets = [0, 0], sizes = [16, 32], strides = [1, 1]} : vector<16x128xbf16> to vector<16x32xbf16>
    %cst_27 = arith.constant dense<0.000000e+00> : vector<16x32xf32>
    %104 = tpu.matmul %22, %103, %cst_27 {dimension_numbers = #tpu.dot_dimension_numbers<[1], [0], [0], [1], [0, 0, 1, 1], [], []>} : vector<16x16xbf16>, vector<16x32xbf16>, vector<16x32xf32> -> vector<16x32xf32>
    %105 = vector.extract_strided_slice %102 {offsets = [0, 64], sizes = [16, 32], strides = [1, 1]} : vector<16x128xbf16> to vector<16x32xbf16>
    %cst_28 = arith.constant dense<0.000000e+00> : vector<16x32xf32>
    %106 = tpu.matmul %24, %105, %cst_28 {dimension_numbers = #tpu.dot_dimension_numbers<[1], [0], [0], [1], [0, 0, 1, 1], [], []>} : vector<16x16xbf16>, vector<16x32xbf16>, vector<16x32xf32> -> vector<16x32xf32>
    %107 = vector.extract_strided_slice %102 {offsets = [0, 32], sizes = [16, 32], strides = [1, 1]} : vector<16x128xbf16> to vector<16x32xbf16>
    %cst_29 = arith.constant dense<0.000000e+00> : vector<16x32xf32>
    %108 = tpu.matmul %23, %107, %cst_29 {dimension_numbers = #tpu.dot_dimension_numbers<[1], [0], [0], [1], [0, 0, 1, 1], [], []>} : vector<16x16xbf16>, vector<16x32xbf16>, vector<16x32xf32> -> vector<16x32xf32>
    %109 = arith.addf %104, %108 : vector<16x32xf32>
    %110 = vector.extract_strided_slice %102 {offsets = [0, 96], sizes = [16, 32], strides = [1, 1]} : vector<16x128xbf16> to vector<16x32xbf16>
    %cst_30 = arith.constant dense<0.000000e+00> : vector<16x32xf32>
    %111 = tpu.matmul %25, %110, %cst_30 {dimension_numbers = #tpu.dot_dimension_numbers<[1], [0], [0], [1], [0, 0, 1, 1], [], []>} : vector<16x16xbf16>, vector<16x32xbf16>, vector<16x32xf32> -> vector<16x32xf32>
    %112 = arith.addf %106, %111 : vector<16x32xf32>
    %113 = tpu.concatenate %109, %112, %98 in 1 : vector<16x32xf32>, vector<16x32xf32>, vector<16x32xf32> -> vector<16x96xf32>
    %114 = arith.truncf %113 : vector<16x96xf32> to vector<16x96xbf16>
    %cst_31 = arith.constant dense<0.000000e+00> : vector<16x64xf32>
    %115 = tpu.matmul %114, %2, %cst_31 {dimension_numbers = #tpu.dot_dimension_numbers<[1], [0], [0], [1], [0, 0, 1, 1], [], []>} : vector<16x96xbf16>, vector<96x64xbf16>, vector<16x64xf32> -> vector<16x64xf32>
    %116 = arith.addf %115, %13 : vector<16x64xf32>
    %117 = arith.negf %116 : vector<16x64xf32>
    %118 = math.exp %117 : vector<16x64xf32>
    %cst_32 = arith.constant 1.000000e+00 : f32
    %119 = vector.broadcast %cst_32 : f32 to vector<16x64xf32>
    %120 = arith.addf %119, %118 : vector<16x64xf32>
    %121 = arith.divf %119, %120 : vector<16x64xf32>
    %122 = vector.extract_strided_slice %121 {offsets = [0, 0], sizes = [16, 32], strides = [1, 1]} : vector<16x64xf32> to vector<16x32xf32>
    %123 = vector.extract_strided_slice %121 {offsets = [0, 32], sizes = [16, 32], strides = [1, 1]} : vector<16x64xf32> to vector<16x32xf32>
    %124 = arith.mulf %122, %98 : vector<16x32xf32>
    %125 = tpu.concatenate %109, %112, %124 in 1 : vector<16x32xf32>, vector<16x32xf32>, vector<16x32xf32> -> vector<16x96xf32>
    %126 = arith.truncf %125 : vector<16x96xf32> to vector<16x96xbf16>
    %cst_33 = arith.constant dense<0.000000e+00> : vector<16x32xf32>
    %127 = tpu.matmul %126, %3, %cst_33 {dimension_numbers = #tpu.dot_dimension_numbers<[1], [0], [0], [1], [0, 0, 1, 1], [], []>} : vector<16x96xbf16>, vector<96x32xbf16>, vector<16x32xf32> -> vector<16x32xf32>
    %128 = arith.addf %127, %16 : vector<16x32xf32>
    %129 = math.tanh %128 : vector<16x32xf32>
    %cst_34 = arith.constant 1.000000e+00 : f32
    %130 = vector.broadcast %cst_34 : f32 to vector<16x32xf32>
    %131 = arith.subf %130, %123 : vector<16x32xf32>
    %132 = arith.mulf %131, %98 : vector<16x32xf32>
    %133 = arith.mulf %123, %129 : vector<16x32xf32>
    %134 = arith.addf %132, %133 : vector<16x32xf32>
    %135 = arith.truncf %134 : vector<16x32xf32> to vector<16x32xbf16>
    %cst_35 = arith.constant dense<0.000000e+00> : vector<16x128xf32>
    %136 = tpu.matmul %135, %0, %cst_35 {dimension_numbers = #tpu.dot_dimension_numbers<[1], [0], [0], [1], [0, 0, 1, 1], [], []>} : vector<16x32xbf16>, vector<32x128xbf16>, vector<16x128xf32> -> vector<16x128xf32>
    %137 = arith.addf %136, %10 : vector<16x128xf32>
    %138 = arith.truncf %137 : vector<16x128xf32> to vector<16x128xbf16>
    %139 = vector.extract_strided_slice %138 {offsets = [0, 0], sizes = [16, 32], strides = [1, 1]} : vector<16x128xbf16> to vector<16x32xbf16>
    %cst_36 = arith.constant dense<0.000000e+00> : vector<16x32xf32>
    %140 = tpu.matmul %22, %139, %cst_36 {dimension_numbers = #tpu.dot_dimension_numbers<[1], [0], [0], [1], [0, 0, 1, 1], [], []>} : vector<16x16xbf16>, vector<16x32xbf16>, vector<16x32xf32> -> vector<16x32xf32>
    %141 = vector.extract_strided_slice %138 {offsets = [0, 64], sizes = [16, 32], strides = [1, 1]} : vector<16x128xbf16> to vector<16x32xbf16>
    %cst_37 = arith.constant dense<0.000000e+00> : vector<16x32xf32>
    %142 = tpu.matmul %24, %141, %cst_37 {dimension_numbers = #tpu.dot_dimension_numbers<[1], [0], [0], [1], [0, 0, 1, 1], [], []>} : vector<16x16xbf16>, vector<16x32xbf16>, vector<16x32xf32> -> vector<16x32xf32>
    %143 = vector.extract_strided_slice %138 {offsets = [0, 32], sizes = [16, 32], strides = [1, 1]} : vector<16x128xbf16> to vector<16x32xbf16>
    %cst_38 = arith.constant dense<0.000000e+00> : vector<16x32xf32>
    %144 = tpu.matmul %23, %143, %cst_38 {dimension_numbers = #tpu.dot_dimension_numbers<[1], [0], [0], [1], [0, 0, 1, 1], [], []>} : vector<16x16xbf16>, vector<16x32xbf16>, vector<16x32xf32> -> vector<16x32xf32>
    %145 = arith.addf %140, %144 : vector<16x32xf32>
    %146 = vector.extract_strided_slice %138 {offsets = [0, 96], sizes = [16, 32], strides = [1, 1]} : vector<16x128xbf16> to vector<16x32xbf16>
    %cst_39 = arith.constant dense<0.000000e+00> : vector<16x32xf32>
    %147 = tpu.matmul %25, %146, %cst_39 {dimension_numbers = #tpu.dot_dimension_numbers<[1], [0], [0], [1], [0, 0, 1, 1], [], []>} : vector<16x16xbf16>, vector<16x32xbf16>, vector<16x32xf32> -> vector<16x32xf32>
    %148 = arith.addf %142, %147 : vector<16x32xf32>
    %149 = tpu.concatenate %145, %148, %134 in 1 : vector<16x32xf32>, vector<16x32xf32>, vector<16x32xf32> -> vector<16x96xf32>
    %150 = arith.truncf %149 : vector<16x96xf32> to vector<16x96xbf16>
    %cst_40 = arith.constant dense<0.000000e+00> : vector<16x64xf32>
    %151 = tpu.matmul %150, %2, %cst_40 {dimension_numbers = #tpu.dot_dimension_numbers<[1], [0], [0], [1], [0, 0, 1, 1], [], []>} : vector<16x96xbf16>, vector<96x64xbf16>, vector<16x64xf32> -> vector<16x64xf32>
    %152 = arith.addf %151, %13 : vector<16x64xf32>
    %153 = arith.negf %152 : vector<16x64xf32>
    %154 = math.exp %153 : vector<16x64xf32>
    %cst_41 = arith.constant 1.000000e+00 : f32
    %155 = vector.broadcast %cst_41 : f32 to vector<16x64xf32>
    %156 = arith.addf %155, %154 : vector<16x64xf32>
    %157 = arith.divf %155, %156 : vector<16x64xf32>
    %158 = vector.extract_strided_slice %157 {offsets = [0, 0], sizes = [16, 32], strides = [1, 1]} : vector<16x64xf32> to vector<16x32xf32>
    %159 = vector.extract_strided_slice %157 {offsets = [0, 32], sizes = [16, 32], strides = [1, 1]} : vector<16x64xf32> to vector<16x32xf32>
    %160 = arith.mulf %158, %134 : vector<16x32xf32>
    %161 = tpu.concatenate %145, %148, %160 in 1 : vector<16x32xf32>, vector<16x32xf32>, vector<16x32xf32> -> vector<16x96xf32>
    %162 = arith.truncf %161 : vector<16x96xf32> to vector<16x96xbf16>
    %cst_42 = arith.constant dense<0.000000e+00> : vector<16x32xf32>
    %163 = tpu.matmul %162, %3, %cst_42 {dimension_numbers = #tpu.dot_dimension_numbers<[1], [0], [0], [1], [0, 0, 1, 1], [], []>} : vector<16x96xbf16>, vector<96x32xbf16>, vector<16x32xf32> -> vector<16x32xf32>
    %164 = arith.addf %163, %16 : vector<16x32xf32>
    %165 = math.tanh %164 : vector<16x32xf32>
    %cst_43 = arith.constant 1.000000e+00 : f32
    %166 = vector.broadcast %cst_43 : f32 to vector<16x32xf32>
    %167 = arith.subf %166, %159 : vector<16x32xf32>
    %168 = arith.mulf %167, %134 : vector<16x32xf32>
    %169 = arith.mulf %159, %165 : vector<16x32xf32>
    %170 = arith.addf %168, %169 : vector<16x32xf32>
    %c0_44 = arith.constant 0 : index
    %c0_45 = arith.constant 0 : index
    %171 = vector.load %arg1[%c0_44, %c0_45] : memref<16x8xf32, #tpu.memory_space<vmem>>, vector<16x8xf32>
    %172 = tpu.concatenate %170, %171 in 1 : vector<16x32xf32>, vector<16x8xf32> -> vector<16x40xf32>
    %173 = arith.truncf %172 : vector<16x40xf32> to vector<16x40xbf16>
    %cst_46 = arith.constant dense<0.000000e+00> : vector<16x32xf32>
    %174 = tpu.matmul %173, %5, %cst_46 {dimension_numbers = #tpu.dot_dimension_numbers<[1], [0], [0], [1], [0, 0, 1, 1], [], []>} : vector<16x40xbf16>, vector<40x32xbf16>, vector<16x32xf32> -> vector<16x32xf32>
    %175 = arith.addf %174, %19 : vector<16x32xf32>
    %176 = math.tanh %175 : vector<16x32xf32>
    %177 = arith.truncf %176 : vector<16x32xf32> to vector<16x32xbf16>
    %cst_47 = arith.constant dense<0.000000e+00> : vector<16x1xf32>
    %178 = tpu.matmul %177, %6, %cst_47 {dimension_numbers = #tpu.dot_dimension_numbers<[1], [0], [0], [1], [0, 0, 1, 1], [], []>} : vector<16x32xbf16>, vector<32x1xbf16>, vector<16x1xf32> -> vector<16x1xf32>
    %179 = vector.broadcast %20 : vector<1x1xf32> to vector<16x1xf32>
    %180 = arith.addf %178, %179 : vector<16x1xf32>
    %c0_48 = arith.constant 0 : index
    %c0_49 = arith.constant 0 : index
    %181 = vector.load %arg5[%c0_48, %c0_49] : memref<16x1xf32, #tpu.memory_space<vmem>>, vector<16x1xf32>
    tpu.vector_store %arg5[%c0_48, %c0_49], %180 {strides = array<i32>} : memref<16x1xf32, #tpu.memory_space<vmem>>, vector<16x1xf32>,
    return
  }
}

</mosaic_0001>

<llo_original>
// kernel: forward.1
$region0: #{forward.1}
  #allocation0 [shape = 'u32[]', space=smem, size = 0x4, offset = 0x4, fixed_abs, tag = 'smem constant byte address 0x4 - core index']
  #allocation1 [shape = 'u32[144,128]{1,0:T(1,128)}', space=vmem, size = 0x12000, scoped, tag = 'internal scratch']
  %s0 = inlined_call_operand.vmem [shape: f32[16,32], index: 0, kind: input, shape index: {}]
  %s1 = inlined_call_operand.vmem [shape: f32[16,8], index: 1, kind: input, shape index: {}]
  %s2 = inlined_call_operand.vmem [shape: bf16[64,16], index: 2, kind: input, shape index: {}]
  %s3 = inlined_call_operand.vmem [shape: bf16[176,128], index: 3, kind: input, shape index: {}]
  %s4 = inlined_call_operand.vmem [shape: f32[8,128], index: 4, kind: input, shape index: {}]
  %s5 = inlined_call_operand.vmem [shape: f32[16,1], index: 5, kind: output, shape index: {}]
  %s6 = sld [smem:[#allocation0]]
  $region30: #{forward.1} parent=0
    _
  %s8 = ssub.s32 1, %s6
  %s9 = scalar_select 0, %s8, %s6
  // Predicated region
  $region2: #{forward.1} parent=0 // pred_check
    _
  $region3: #{forward.1} parent=0 // pred_check_branch
    %11 = sbr.rel (0) target = $region5
  $region4: #{forward.1} parent=0 // pred_region
    _
  $region5: #{forward.1} parent=0 // pred_fallthru
    _
  // Predicated region
  $region6: #{forward.1} parent=0 // pred_check
    _
  $region7: #{forward.1} parent=0 // pred_check_branch
    %13 = sbr.rel (0) target = $region9
  $region8: #{forward.1} parent=0 // pred_region
    _
  $region9: #{forward.1} parent=0 // pred_fallthru
    _
  // Predicated region
  $region10: #{forward.1} parent=0 // pred_check
    _
  $region11: #{forward.1} parent=0 // pred_check_branch
    %15 = sbr.rel (0) target = $region13
  $region12: #{forward.1} parent=0 // pred_region
    _
  $region13: #{forward.1} parent=0 // pred_fallthru
    _
  // Predicated region
  $region14: #{forward.1} parent=0 // pred_check
    _
  $region15: #{forward.1} parent=0 // pred_check_branch
    %17 = sbr.rel (0) target = $region17
  $region16: #{forward.1} parent=0 // pred_region
    _
  $region17: #{forward.1} parent=0 // pred_fallthru
    _
  // Predicated region
  $region18: #{forward.1} parent=0 // pred_check
    _
  $region19: #{forward.1} parent=0 // pred_check_branch
    %19 = sbr.rel (0) target = $region21
  $region20: #{forward.1} parent=0 // pred_region
    _
  $region21: #{forward.1} parent=0 // pred_fallthru
    _
  %v21 = vld [vmem:[%s3] sm:$0xf]
  %v22 = vld [vmem:[%s3 + $0x4] sm:$0xf]
  %v23 = vld [vmem:[%s3 + $0x8] sm:$0xf]
  %v24 = vld [vmem:[%s3 + $0xc] sm:$0xf]
  %v25 = vld [vmem:[%s3 + $0x10] sm:$0xf]
  %v26 = vld [vmem:[%s3 + $0x14] sm:$0xf]
  %v27 = vld [vmem:[%s3 + $0x18] sm:$0xf]
  %v28 = vld [vmem:[%s3 + $0x1c] sm:$0xf]
  %v29 = vld [vmem:[%s3 + $0x20] sm:$0xf]
  %v30 = vld [vmem:[%s3 + $0x24] sm:$0xf]
  %v31 = vld [vmem:[%s3 + $0x28] sm:$0xf]
  %v32 = vld [vmem:[%s3 + $0x2c] sm:$0xf]
  %v33 = vld [vmem:[%s3 + $0x30] sm:$0xf]
  %v34 = vld [vmem:[%s3 + $0x34] sm:$0xf]
  %v35 = vld [vmem:[%s3 + $0x38] sm:$0xf]
  %v36 = vld [vmem:[%s3 + $0x3c] sm:$0xf]
  %v37 = vld [vmem:[%s3 + $0x40] sm:$0xf]
  %v38 = vld [vmem:[%s3 + $0x44] sm:$0xf]
  %v39 = vld [vmem:[%s3 + $0x48] sm:$0xf]
  %v40 = vld [vmem:[%s3 + $0x4c] sm:$0xf]
  %v41 = vld [vmem:[%s3 + $0x50] sm:$0xf]
  %v42 = vld [vmem:[%s4] sm:$0xff]
  %v43 = vlaneseq
  %v44 = vshrl.u32 %v43, 7
  %v45 = vsub.s32 0, %v44
  %v46 = vrot.slane %v42, %v45
  %v47 = vlaneseq
  %v48 = vshrl.u32 %v47, 7
  %v49 = vsub.s32 1, %v48
  %v50 = vrot.slane %v42, %v49
  %v51 = vld [vmem:[%s2] sm:$0xf]
  %v52 = vld [vmem:[%s2 + $0x4] sm:$0xf]
  %v53 = vld [vmem:[%s2 + $0x8] sm:$0xf]
  %v54 = vld [vmem:[%s2 + $0xc] sm:$0xf]
  %v55 = vld [vmem:[%s2 + $0x10] sm:$0xf]
  %v56 = vld [vmem:[%s2 + $0x14] sm:$0xf]
  %v57 = vld [vmem:[%s2 + $0x18] sm:$0xf]
  %v58 = vld [vmem:[%s2 + $0x1c] sm:$0xf]
  %v59 = vld [vmem:[%s0] sm:$0xff]
  %v60 = vld [vmem:[%s0 + $0x8] sm:$0xff]
  %v61 = vpack.c.bf16 %v60, %v59
  %v66 = vunpack.c.l.b16 %v21
  %v67 = vunpack.c.l.b16 %v22
  %v68 = vunpack.c.l.b16 %v23
  %v69 = vunpack.c.l.b16 %v24
  %v70 = vpack.c.b16 %v67, %v66
  %v71 = vpack.c.b16 %v69, %v68
  %vm74 = vcmask 261120
  %v76 = vsel %vm74, %v61, 0
  %78 = vmatprep.subr.bf16.mxu0 0
  %79 = vmatpush1.bf16.msra.mxu0 %v70
  %80 = vmatprep.subr.bf16.mxu0 0
  %81 = vmatpush1.bf16.msra.mxu0 %v71
  %82 = vmatprep.subr.bf16.mxu0 0
  %83 = vmatpush1.bf16.msra.mxu0 0
  %84 = vmatprep.subr.bf16.mxu0 0
  %85 = vmatpush1.bf16.msra.mxu0 0
  %86 = vmatprep.subr.bf16.mxu0 0
  %87 = vmatpush1.bf16.msra.mxu0 0
  %88 = vmatprep.subr.bf16.mxu0 0
  %89 = vmatpush1.bf16.msra.mxu0 0
  %90 = vmatprep.subr.bf16.mxu0 0
  %91 = vmatpush1.bf16.msra.mxu0 0
  %92 = vmatprep.subr.bf16.mxu0 0
  %93 = vmatpush1.bf16.msra.mxu0 0
  %94 = vmatprep.subr.bf16.mxu0 0
  %95 = vmatpush1.bf16.msra.mxu0 0
  %96 = vmatprep.subr.bf16.mxu0 0
  %97 = vmatpush1.bf16.msra.mxu0 0
  %98 = vmatprep.subr.bf16.mxu0 0
  %99 = vmatpush1.bf16.msra.mxu0 0
  %100 = vmatprep.subr.bf16.mxu0 0
  %101 = vmatpush1.bf16.msra.mxu0 0
  %102 = vmatprep.subr.bf16.mxu0 0
  %103 = vmatpush1.bf16.msra.mxu0 0
  %104 = vmatprep.subr.bf16.mxu0 0
  %105 = vmatpush1.bf16.msra.mxu0 0
  %106 = vmatprep.subr.bf16.mxu0 0
  %107 = vmatpush1.bf16.msra.mxu0 0
  %108 = vmatprep.subr.bf16.mxu0 0
  %109 = vmatpush1.bf16.msra.mxu0 0
  %110 = vmatprep.mubr.bf16.mxu0 0
  %111 = vmatmul.mubr.bf16.gmra.mrb[0].mxu0 %v76
  %v112 = vpop.f32.mrb[0].mxu0
  %v113 = vadd.f32 %v46, %v112
  %v114 = vpop.f32.mrb[0].mxu0
  %v115 = vpop.f32.mrb[0].mxu0
  %v116 = vadd.f32 %v46, %v115
  %v117 = vpop.f32.mrb[0].mxu0
  %118 = vdwg.mxu0
  %v119 = vpack.c.bf16 %v116, %v113
  %v122 = vunpack.c.l.b16 %v53
  %v123 = vunpack.c.l.b16 %v54
  %v124 = vpack.c.b16 %v123, %v122
  %126 = vrot.lane.b32.xlu0 %v119, 96
  %v127 = vpop.permute.xlu0 %126
  %vm129 = vcmask 130048
  %v131 = vsel %vm129, %v124, 0
  %133 = vmatprep.subr.bf16.mxu0 0
  %134 = vmatpush1.bf16.msra.mxu0 %v127
  %135 = vmatprep.subr.bf16.mxu0 0
  %136 = vmatpush1.bf16.msra.mxu0 0
  %137 = vmatprep.subr.bf16.mxu0 0
  %138 = vmatpush1.bf16.msra.mxu0 0
  %139 = vmatprep.subr.bf16.mxu0 0
  %140 = vmatpush1.bf16.msra.mxu0 0
  %141 = vmatprep.subr.bf16.mxu0 0
  %142 = vmatpush1.bf16.msra.mxu0 0
  %143 = vmatprep.subr.bf16.mxu0 0
  %144 = vmatpush1.bf16.msra.mxu0 0
  %145 = vmatprep.subr.bf16.mxu0 0
  %146 = vmatpush1.bf16.msra.mxu0 0
  %147 = vmatprep.subr.bf16.mxu0 0
  %148 = vmatpush1.bf16.msra.mxu0 0
  %149 = vmatprep.subr.bf16.mxu0 0
  %150 = vmatpush1.bf16.msra.mxu0 0
  %151 = vmatprep.subr.bf16.mxu0 0
  %152 = vmatpush1.bf16.msra.mxu0 0
  %153 = vmatprep.subr.bf16.mxu0 0
  %154 = vmatpush1.bf16.msra.mxu0 0
  %155 = vmatprep.subr.bf16.mxu0 0
  %156 = vmatpush1.bf16.msra.mxu0 0
  %157 = vmatprep.subr.bf16.mxu0 0
  %158 = vmatpush1.bf16.msra.mxu0 0
  %159 = vmatprep.subr.bf16.mxu0 0
  %160 = vmatpush1.bf16.msra.mxu0 0
  %161 = vmatprep.subr.bf16.mxu0 0
  %162 = vmatpush1.bf16.msra.mxu0 0
  %163 = vmatprep.subr.bf16.mxu0 0
  %164 = vmatpush1.bf16.msra.mxu0 0
  %165 = vmatprep.mubr.bf16.mxu0 0
  %166 = vmatmul.mubr.bf16.gmra.mrb[0].mxu0 %v131
  %v167 = vpop.f32.mrb[0].mxu0
  %v168 = vadd.f32 0.0, %v167
  %v169 = vpop.f32.mrb[0].mxu0
  %v170 = vpop.f32.mrb[0].mxu0
  %v171 = vadd.f32 0.0, %v170
  %v172 = vpop.f32.mrb[0].mxu0
  %173 = vdwg.mxu0
  %v176 = vunpack.c.l.b16 %v51
  %v177 = vunpack.c.l.b16 %v52
  %v178 = vpack.c.b16 %v177, %v176
  %v180 = vsel %vm129, %v178, 0
  %182 = vmatprep.subr.bf16.mxu0 0
  %183 = vmatpush1.bf16.msra.mxu0 %v119
  %184 = vmatprep.subr.bf16.mxu0 0
  %185 = vmatpush1.bf16.msra.mxu0 0
  %186 = vmatprep.subr.bf16.mxu0 0
  %187 = vmatpush1.bf16.msra.mxu0 0
  %188 = vmatprep.subr.bf16.mxu0 0
  %189 = vmatpush1.bf16.msra.mxu0 0
  %190 = vmatprep.subr.bf16.mxu0 0
  %191 = vmatpush1.bf16.msra.mxu0 0
  %192 = vmatprep.subr.bf16.mxu0 0
  %193 = vmatpush1.bf16.msra.mxu0 0
  %194 = vmatprep.subr.bf16.mxu0 0
  %195 = vmatpush1.bf16.msra.mxu0 0
  %196 = vmatprep.subr.bf16.mxu0 0
  %197 = vmatpush1.bf16.msra.mxu0 0
  %198 = vmatprep.subr.bf16.mxu0 0
  %199 = vmatpush1.bf16.msra.mxu0 0
  %200 = vmatprep.subr.bf16.mxu0 0
  %201 = vmatpush1.bf16.msra.mxu0 0
  %202 = vmatprep.subr.bf16.mxu0 0
  %203 = vmatpush1.bf16.msra.mxu0 0
  %204 = vmatprep.subr.bf16.mxu0 0
  %205 = vmatpush1.bf16.msra.mxu0 0
  %206 = vmatprep.subr.bf16.mxu0 0
  %207 = vmatpush1.bf16.msra.mxu0 0
  %208 = vmatprep.subr.bf16.mxu0 0
  %209 = vmatpush1.bf16.msra.mxu0 0
  %210 = vmatprep.subr.bf16.mxu0 0
  %211 = vmatpush1.bf16.msra.mxu0 0
  %212 = vmatprep.subr.bf16.mxu0 0
  %213 = vmatpush1.bf16.msra.mxu0 0
  %214 = vmatprep.mubr.bf16.mxu0 0
  %215 = vmatmul.mubr.bf16.gmra.mrb[0].mxu0 %v180
  %v216 = vpop.f32.mrb[0].mxu0
  %v217 = vadd.f32 %v168, %v216
  %v218 = vpop.f32.mrb[0].mxu0
  %v219 = vpop.f32.mrb[0].mxu0
  %v220 = vadd.f32 %v171, %v219
  %v221 = vpop.f32.mrb[0].mxu0
  %222 = vdwg.mxu0
  %v225 = vunpack.c.l.b16 %v57
  %v226 = vunpack.c.l.b16 %v58
  %v227 = vpack.c.b16 %v226, %v225
  %228 = vrot.lane.b32.xlu0 %v119, 32
  %v229 = vpop.permute.xlu0 %228
  %v232 = vsel %vm129, %v227, 0
  %234 = vmatprep.subr.bf16.mxu0 0
  %235 = vmatpush1.bf16.msra.mxu0 %v229
  %236 = vmatprep.subr.bf16.mxu0 0
  %237 = vmatpush1.bf16.msra.mxu0 0
  %238 = vmatprep.subr.bf16.mxu0 0
  %239 = vmatpush1.bf16.msra.mxu0 0
  %240 = vmatprep.subr.bf16.mxu0 0
  %241 = vmatpush1.bf16.msra.mxu0 0
  %242 = vmatprep.subr.bf16.mxu0 0
  %243 = vmatpush1.bf16.msra.mxu0 0
  %244 = vmatprep.subr.bf16.mxu0 0
  %245 = vmatpush1.bf16.msra.mxu0 0
  %246 = vmatprep.subr.bf16.mxu0 0
  %247 = vmatpush1.bf16.msra.mxu0 0
  %248 = vmatprep.subr.bf16.mxu0 0
  %249 = vmatpush1.bf16.msra.mxu0 0
  %250 = vmatprep.subr.bf16.mxu0 0
  %251 = vmatpush1.bf16.msra.mxu0 0
  %252 = vmatprep.subr.bf16.mxu0 0
  %253 = vmatpush1.bf16.msra.mxu0 0
  %254 = vmatprep.subr.bf16.mxu0 0
  %255 = vmatpush1.bf16.msra.mxu0 0
  %256 = vmatprep.subr.bf16.mxu0 0
  %257 = vmatpush1.bf16.msra.mxu0 0
  %258 = vmatprep.subr.bf16.mxu0 0
  %259 = vmatpush1.bf16.msra.mxu0 0
  %260 = vmatprep.subr.bf16.mxu0 0
  %261 = vmatpush1.bf16.msra.mxu0 0
  %262 = vmatprep.subr.bf16.mxu0 0
  %263 = vmatpush1.bf16.msra.mxu0 0
  %264 = vmatprep.subr.bf16.mxu0 0
  %265 = vmatpush1.bf16.msra.mxu0 0
  %266 = vmatprep.mubr.bf16.mxu0 0
  %267 = vmatmul.mubr.bf16.gmra.mrb[0].mxu0 %v232
  %v268 = vpop.f32.mrb[0].mxu0
  %v269 = vadd.f32 0.0, %v268
  %v270 = vpop.f32.mrb[0].mxu0
  %v271 = vpop.f32.mrb[0].mxu0
  %v272 = vadd.f32 0.0, %v271
  %v273 = vpop.f32.mrb[0].mxu0
  %274 = vdwg.mxu0
  %v277 = vunpack.c.l.b16 %v55
  %v278 = vunpack.c.l.b16 %v56
  %v279 = vpack.c.b16 %v278, %v277
  %280 = vrot.lane.b32.xlu0 %v119, 64
  %v281 = vpop.permute.xlu0 %280
  %v284 = vsel %vm129, %v279, 0
  %286 = vmatprep.subr.bf16.mxu0 0
  %287 = vmatpush1.bf16.msra.mxu0 %v281
  %288 = vmatprep.subr.bf16.mxu0 0
  %289 = vmatpush1.bf16.msra.mxu0 0
  %290 = vmatprep.subr.bf16.mxu0 0
  %291 = vmatpush1.bf16.msra.mxu0 0
  %292 = vmatprep.subr.bf16.mxu0 0
  %293 = vmatpush1.bf16.msra.mxu0 0
  %294 = vmatprep.subr.bf16.mxu0 0
  %295 = vmatpush1.bf16.msra.mxu0 0
  %296 = vmatprep.subr.bf16.mxu0 0
  %297 = vmatpush1.bf16.msra.mxu0 0
  %298 = vmatprep.subr.bf16.mxu0 0
  %299 = vmatpush1.bf16.msra.mxu0 0
  %300 = vmatprep.subr.bf16.mxu0 0
  %301 = vmatpush1.bf16.msra.mxu0 0
  %302 = vmatprep.subr.bf16.mxu0 0
  %303 = vmatpush1.bf16.msra.mxu0 0
  %304 = vmatprep.subr.bf16.mxu0 0
  %305 = vmatpush1.bf16.msra.mxu0 0
  %306 = vmatprep.subr.bf16.mxu0 0
  %307 = vmatpush1.bf16.msra.mxu0 0
  %308 = vmatprep.subr.bf16.mxu0 0
  %309 = vmatpush1.bf16.msra.mxu0 0
  %310 = vmatprep.subr.bf16.mxu0 0
  %311 = vmatpush1.bf16.msra.mxu0 0
  %312 = vmatprep.subr.bf16.mxu0 0
  %313 = vmatpush1.bf16.msra.mxu0 0
  %314 = vmatprep.subr.bf16.mxu0 0
  %315 = vmatpush1.bf16.msra.mxu0 0
  %316 = vmatprep.subr.bf16.mxu0 0
  %317 = vmatpush1.bf16.msra.mxu0 0
  %318 = vmatprep.mubr.bf16.mxu0 0
  %319 = vmatmul.mubr.bf16.gmra.mrb[0].mxu0 %v284
  %v320 = vpop.f32.mrb[0].mxu0
  %v321 = vadd.f32 %v269, %v320
  %v322 = vpop.f32.mrb[0].mxu0
  %v323 = vpop.f32.mrb[0].mxu0
  %v324 = vadd.f32 %v272, %v323
  %v325 = vpop.f32.mrb[0].mxu0
  %326 = vdwg.mxu0
  %329 = vrot.lane.b32.xlu0 %v321, 32
  %v330 = vpop.permute.xlu0 %329
  %331 = vrot.lane.b32.xlu0 %v324, 32
  %v332 = vpop.permute.xlu0 %331
  %337 = vrot.lane.b32.xlu0 %v59, 64
  %v338 = vpop.permute.xlu0 %337
  %339 = vrot.lane.b32.xlu0 %v60, 64
  %v340 = vpop.permute.xlu0 %339
  %v343 = vsel %vm74, %v217, %v330
  %v344 = vsel %vm74, %v220, %v332
  %vm345 = vcmask 523264
  %v346 = vsel %vm345, %v343, %v338
  %v347 = vsel %vm345, %v344, %v340
  %v348 = vpack.c.bf16 %v347, %v346
  %v361 = vunpack.c.l.b16 %v25
  %v362 = vunpack.c.l.b16 %v26
  %v363 = vunpack.c.l.b16 %v27
  %v364 = vunpack.c.l.b16 %v28
  %v365 = vunpack.c.l.b16 %v29
  %v366 = vunpack.c.l.b16 %v30
  %v367 = vunpack.c.l.b16 %v31
  %v368 = vunpack.c.l.b16 %v32
  %v369 = vunpack.c.l.b16 %v33
  %v370 = vunpack.c.l.b16 %v34
  %v371 = vunpack.c.l.b16 %v35
  %v372 = vunpack.c.l.b16 %v36
  %v373 = vpack.c.b16 %v362, %v361
  %v374 = vpack.c.b16 %v364, %v363
  %v375 = vpack.c.b16 %v366, %v365
  %v376 = vpack.c.b16 %v368, %v367
  %v377 = vpack.c.b16 %v370, %v369
  %v378 = vpack.c.b16 %v372, %v371
  %vm385 = vcmask 785408
  %v387 = vsel %vm385, %v348, 0
  %389 = vmatprep.subr.bf16.mxu0 0
  %390 = vmatpush1.bf16.msra.mxu0 %v373
  %391 = vmatprep.subr.bf16.mxu0 0
  %392 = vmatpush1.bf16.msra.mxu0 %v374
  %393 = vmatprep.subr.bf16.mxu0 0
  %394 = vmatpush1.bf16.msra.mxu0 %v375
  %395 = vmatprep.subr.bf16.mxu0 0
  %396 = vmatpush1.bf16.msra.mxu0 %v376
  %397 = vmatprep.subr.bf16.mxu0 0
  %398 = vmatpush1.bf16.msra.mxu0 %v377
  %399 = vmatprep.subr.bf16.mxu0 0
  %400 = vmatpush1.bf16.msra.mxu0 %v378
  %401 = vmatprep.subr.bf16.mxu0 0
  %402 = vmatpush1.bf16.msra.mxu0 0
  %403 = vmatprep.subr.bf16.mxu0 0
  %404 = vmatpush1.bf16.msra.mxu0 0
  %405 = vmatprep.subr.bf16.mxu0 0
  %406 = vmatpush1.bf16.msra.mxu0 0
  %407 = vmatprep.subr.bf16.mxu0 0
  %408 = vmatpush1.bf16.msra.mxu0 0
  %409 = vmatprep.subr.bf16.mxu0 0
  %410 = vmatpush1.bf16.msra.mxu0 0
  %411 = vmatprep.subr.bf16.mxu0 0
  %412 = vmatpush1.bf16.msra.mxu0 0
  %413 = vmatprep.subr.bf16.mxu0 0
  %414 = vmatpush1.bf16.msra.mxu0 0
  %415 = vmatprep.subr.bf16.mxu0 0
  %416 = vmatpush1.bf16.msra.mxu0 0
  %417 = vmatprep.subr.bf16.mxu0 0
  %418 = vmatpush1.bf16.msra.mxu0 0
  %419 = vmatprep.subr.bf16.mxu0 0
  %420 = vmatpush1.bf16.msra.mxu0 0
  %421 = vmatprep.mubr.bf16.mxu0 0
  %422 = vmatmul.mubr.bf16.gmra.mrb[0].mxu0 %v387
  %v423 = vpop.f32.mrb[0].mxu0
  %v424 = vadd.f32 %v50, %v423
  %v425 = vpop.f32.mrb[0].mxu0
  %v426 = vpop.f32.mrb[0].mxu0
  %v427 = vadd.f32 %v50, %v426
  %v428 = vpop.f32.mrb[0].mxu0
  %429 = vdwg.mxu0
  %v430 = vxor.u32 %v424, 2147483648
  %v431 = vxor.u32 %v427, 2147483648
  %v432 = vmul.f32 %v430, 1.442695
  %v433 = vpow.pop %v432
  %v434 = vmul.f32 %v431, 1.442695
  %v435 = vpow.pop %v434
  %v436 = vadd.f32 %v433, 1.0
  %v437 = vadd.f32 %v435, 1.0
  %v438 = vrcp.pop %v436
  %v439 = vmul.f32 1.0, %v438
  %v440 = vrcp.pop %v437
  %v441 = vmul.f32 1.0, %v440
  %v442 = vmul.f32 %v439, %v59
  %v443 = vmul.f32 %v441, %v60
  %446 = vrot.lane.b32.xlu0 %v442, 64
  %v447 = vpop.permute.xlu0 %446
  %448 = vrot.lane.b32.xlu0 %v443, 64
  %v449 = vpop.permute.xlu0 %448
  %v452 = vsel %vm345, %v343, %v447
  %v453 = vsel %vm345, %v344, %v449
  %v454 = vpack.c.bf16 %v453, %v452
  %455 = vrot.lane.b32.xlu0 %v373, 64
  %v456 = vpop.permute.xlu0 %455
  %457 = vrot.lane.b32.xlu0 %v374, 64
  %v458 = vpop.permute.xlu0 %457
  %459 = vrot.lane.b32.xlu0 %v375, 64
  %v460 = vpop.permute.xlu0 %459
  %461 = vrot.lane.b32.xlu0 %v376, 64
  %v462 = vpop.permute.xlu0 %461
  %463 = vrot.lane.b32.xlu0 %v377, 64
  %v464 = vpop.permute.xlu0 %463
  %465 = vrot.lane.b32.xlu0 %v378, 64
  %v466 = vpop.permute.xlu0 %465
  %474 = vrot.lane.b32.xlu0 %v50, 64
  %v475 = vpop.permute.xlu0 %474
  %v478 = vsel %vm385, %v454, 0
  %480 = vmatprep.subr.bf16.mxu0 0
  %481 = vmatpush1.bf16.msra.mxu0 %v456
  %482 = vmatprep.subr.bf16.mxu0 0
  %483 = vmatpush1.bf16.msra.mxu0 %v458
  %484 = vmatprep.subr.bf16.mxu0 0
  %485 = vmatpush1.bf16.msra.mxu0 %v460
  %486 = vmatprep.subr.bf16.mxu0 0
  %487 = vmatpush1.bf16.msra.mxu0 %v462
  %488 = vmatprep.subr.bf16.mxu0 0
  %489 = vmatpush1.bf16.msra.mxu0 %v464
  %490 = vmatprep.subr.bf16.mxu0 0
  %491 = vmatpush1.bf16.msra.mxu0 %v466
  %492 = vmatprep.subr.bf16.mxu0 0
  %493 = vmatpush1.bf16.msra.mxu0 0
  %494 = vmatprep.subr.bf16.mxu0 0
  %495 = vmatpush1.bf16.msra.mxu0 0
  %496 = vmatprep.subr.bf16.mxu0 0
  %497 = vmatpush1.bf16.msra.mxu0 0
  %498 = vmatprep.subr.bf16.mxu0 0
  %499 = vmatpush1.bf16.msra.mxu0 0
  %500 = vmatprep.subr.bf16.mxu0 0
  %501 = vmatpush1.bf16.msra.mxu0 0
  %502 = vmatprep.subr.bf16.mxu0 0
  %503 = vmatpush1.bf16.msra.mxu0 0
  %504 = vmatprep.subr.bf16.mxu0 0
  %505 = vmatpush1.bf16.msra.mxu0 0
  %506 = vmatprep.subr.bf16.mxu0 0
  %507 = vmatpush1.bf16.msra.mxu0 0
  %508 = vmatprep.subr.bf16.mxu0 0
  %509 = vmatpush1.bf16.msra.mxu0 0
  %510 = vmatprep.subr.bf16.mxu0 0
  %511 = vmatpush1.bf16.msra.mxu0 0
  %512 = vmatprep.mubr.bf16.mxu0 0
  %513 = vmatmul.mubr.bf16.gmra.mrb[0].mxu0 %v478
  %v514 = vpop.f32.mrb[0].mxu0
  %v515 = vadd.f32 %v475, %v514
  %v516 = vpop.f32.mrb[0].mxu0
  %v517 = vpop.f32.mrb[0].mxu0
  %v518 = vadd.f32 %v475, %v517
  %v519 = vpop.f32.mrb[0].mxu0
  %520 = vdwg.mxu0
  %v521 = vtanh.pop %v515
  %v522 = vtanh.pop %v518
  %v523 = vsub.f32 1.0, %v439
  %v524 = vsub.f32 1.0, %v441
  %525 = vrot.lane.b32.xlu0 %v59, 32
  %v526 = vpop.permute.xlu0 %525
  %527 = vrot.lane.b32.xlu0 %v60, 32
  %v528 = vpop.permute.xlu0 %527
  %v531 = vmul.f32 %v523, %v526
  %v532 = vmul.f32 %v524, %v528
  %535 = vrot.lane.b32.xlu0 %v521, 32
  %v536 = vpop.permute.xlu0 %535
  %537 = vrot.lane.b32.xlu0 %v522, 32
  %v538 = vpop.permute.xlu0 %537
  %v541 = vmul.f32 %v439, %v536
  %v542 = vmul.f32 %v441, %v538
  %v543 = vadd.f32 %v531, %v541
  %v544 = vadd.f32 %v532, %v542
  %v545 = vpack.c.bf16 %v544, %v543
  %547 = vrot.lane.b32.xlu0 %v545, 96
  %v548 = vpop.permute.xlu0 %547
  %v550 = vsel %vm74, %v548, 0
  %552 = vmatprep.subr.bf16.mxu0 0
  %553 = vmatpush1.bf16.msra.mxu0 %v70
  %554 = vmatprep.subr.bf16.mxu0 0
  %555 = vmatpush1.bf16.msra.mxu0 %v71
  %556 = vmatprep.subr.bf16.mxu0 0
  %557 = vmatpush1.bf16.msra.mxu0 0
  %558 = vmatprep.subr.bf16.mxu0 0
  %559 = vmatpush1.bf16.msra.mxu0 0
  %560 = vmatprep.subr.bf16.mxu0 0
  %561 = vmatpush1.bf16.msra.mxu0 0
  %562 = vmatprep.subr.bf16.mxu0 0
  %563 = vmatpush1.bf16.msra.mxu0 0
  %564 = vmatprep.subr.bf16.mxu0 0
  %565 = vmatpush1.bf16.msra.mxu0 0
  %566 = vmatprep.subr.bf16.mxu0 0
  %567 = vmatpush1.bf16.msra.mxu0 0
  %568 = vmatprep.subr.bf16.mxu0 0
  %569 = vmatpush1.bf16.msra.mxu0 0
  %570 = vmatprep.subr.bf16.mxu0 0
  %571 = vmatpush1.bf16.msra.mxu0 0
  %572 = vmatprep.subr.bf16.mxu0 0
  %573 = vmatpush1.bf16.msra.mxu0 0
  %574 = vmatprep.subr.bf16.mxu0 0
  %575 = vmatpush1.bf16.msra.mxu0 0
  %576 = vmatprep.subr.bf16.mxu0 0
  %577 = vmatpush1.bf16.msra.mxu0 0
  %578 = vmatprep.subr.bf16.mxu0 0
  %579 = vmatpush1.bf16.msra.mxu0 0
  %580 = vmatprep.subr.bf16.mxu0 0
  %581 = vmatpush1.bf16.msra.mxu0 0
  %582 = vmatprep.subr.bf16.mxu0 0
  %583 = vmatpush1.bf16.msra.mxu0 0
  %584 = vmatprep.mubr.bf16.mxu0 0
  %585 = vmatmul.mubr.bf16.gmra.mrb[0].mxu0 %v550
  %v586 = vpop.f32.mrb[0].mxu0
  %v587 = vadd.f32 %v46, %v586
  %v588 = vpop.f32.mrb[0].mxu0
  %v589 = vpop.f32.mrb[0].mxu0
  %v590 = vadd.f32 %v46, %v589
  %v591 = vpop.f32.mrb[0].mxu0
  %592 = vdwg.mxu0
  %v593 = vpack.c.bf16 %v590, %v587
  %595 = vrot.lane.b32.xlu0 %v593, 96
  %v596 = vpop.permute.xlu0 %595
  %598 = vmatprep.subr.bf16.mxu0 0
  %599 = vmatpush1.bf16.msra.mxu0 %v596
  %600 = vmatprep.subr.bf16.mxu0 0
  %601 = vmatpush1.bf16.msra.mxu0 0
  %602 = vmatprep.subr.bf16.mxu0 0
  %603 = vmatpush1.bf16.msra.mxu0 0
  %604 = vmatprep.subr.bf16.mxu0 0
  %605 = vmatpush1.bf16.msra.mxu0 0
  %606 = vmatprep.subr.bf16.mxu0 0
  %607 = vmatpush1.bf16.msra.mxu0 0
  %608 = vmatprep.subr.bf16.mxu0 0
  %609 = vmatpush1.bf16.msra.mxu0 0
  %610 = vmatprep.subr.bf16.mxu0 0
  %611 = vmatpush1.bf16.msra.mxu0 0
  %612 = vmatprep.subr.bf16.mxu0 0
  %613 = vmatpush1.bf16.msra.mxu0 0
  %614 = vmatprep.subr.bf16.mxu0 0
  %615 = vmatpush1.bf16.msra.mxu0 0
  %616 = vmatprep.subr.bf16.mxu0 0
  %617 = vmatpush1.bf16.msra.mxu0 0
  %618 = vmatprep.subr.bf16.mxu0 0
  %619 = vmatpush1.bf16.msra.mxu0 0
  %620 = vmatprep.subr.bf16.mxu0 0
  %621 = vmatpush1.bf16.msra.mxu0 0
  %622 = vmatprep.subr.bf16.mxu0 0
  %623 = vmatpush1.bf16.msra.mxu0 0
  %624 = vmatprep.subr.bf16.mxu0 0
  %625 = vmatpush1.bf16.msra.mxu0 0
  %626 = vmatprep.subr.bf16.mxu0 0
  %627 = vmatpush1.bf16.msra.mxu0 0
  %628 = vmatprep.subr.bf16.mxu0 0
  %629 = vmatpush1.bf16.msra.mxu0 0
  %630 = vmatprep.mubr.bf16.mxu0 0
  %631 = vmatmul.mubr.bf16.gmra.mrb[0].mxu0 %v131
  %v632 = vpop.f32.mrb[0].mxu0
  %v633 = vadd.f32 0.0, %v632
  %v634 = vpop.f32.mrb[0].mxu0
  %v635 = vpop.f32.mrb[0].mxu0
  %v636 = vadd.f32 0.0, %v635
  %v637 = vpop.f32.mrb[0].mxu0
  %638 = vdwg.mxu0
  %639 = vmatprep.subr.bf16.mxu0 0
  %640 = vmatpush1.bf16.msra.mxu0 %v593
  %641 = vmatprep.subr.bf16.mxu0 0
  %642 = vmatpush1.bf16.msra.mxu0 0
  %643 = vmatprep.subr.bf16.mxu0 0
  %644 = vmatpush1.bf16.msra.mxu0 0
  %645 = vmatprep.subr.bf16.mxu0 0
  %646 = vmatpush1.bf16.msra.mxu0 0
  %647 = vmatprep.subr.bf16.mxu0 0
  %648 = vmatpush1.bf16.msra.mxu0 0
  %649 = vmatprep.subr.bf16.mxu0 0
  %650 = vmatpush1.bf16.msra.mxu0 0
  %651 = vmatprep.subr.bf16.mxu0 0
  %652 = vmatpush1.bf16.msra.mxu0 0
  %653 = vmatprep.subr.bf16.mxu0 0
  %654 = vmatpush1.bf16.msra.mxu0 0
  %655 = vmatprep.subr.bf16.mxu0 0
  %656 = vmatpush1.bf16.msra.mxu0 0
  %657 = vmatprep.subr.bf16.mxu0 0
  %658 = vmatpush1.bf16.msra.mxu0 0
  %659 = vmatprep.subr.bf16.mxu0 0
  %660 = vmatpush1.bf16.msra.mxu0 0
  %661 = vmatprep.subr.bf16.mxu0 0
  %662 = vmatpush1.bf16.msra.mxu0 0
  %663 = vmatprep.subr.bf16.mxu0 0
  %664 = vmatpush1.bf16.msra.mxu0 0
  %665 = vmatprep.subr.bf16.mxu0 0
  %666 = vmatpush1.bf16.msra.mxu0 0
  %667 = vmatprep.subr.bf16.mxu0 0
  %668 = vmatpush1.bf16.msra.mxu0 0
  %669 = vmatprep.subr.bf16.mxu0 0
  %670 = vmatpush1.bf16.msra.mxu0 0
  %671 = vmatprep.mubr.bf16.mxu0 0
  %672 = vmatmul.mubr.bf16.gmra.mrb[0].mxu0 %v180
  %v673 = vpop.f32.mrb[0].mxu0
  %v674 = vadd.f32 %v633, %v673
  %v675 = vpop.f32.mrb[0].mxu0
  %v676 = vpop.f32.mrb[0].mxu0
  %v677 = vadd.f32 %v636, %v676
  %v678 = vpop.f32.mrb[0].mxu0
  %679 = vdwg.mxu0
  %680 = vrot.lane.b32.xlu0 %v593, 32
  %v681 = vpop.permute.xlu0 %680
  %683 = vmatprep.subr.bf16.mxu0 0
  %684 = vmatpush1.bf16.msra.mxu0 %v681
  %685 = vmatprep.subr.bf16.mxu0 0
  %686 = vmatpush1.bf16.msra.mxu0 0
  %687 = vmatprep.subr.bf16.mxu0 0
  %688 = vmatpush1.bf16.msra.mxu0 0
  %689 = vmatprep.subr.bf16.mxu0 0
  %690 = vmatpush1.bf16.msra.mxu0 0
  %691 = vmatprep.subr.bf16.mxu0 0
  %692 = vmatpush1.bf16.msra.mxu0 0
  %693 = vmatprep.subr.bf16.mxu0 0
  %694 = vmatpush1.bf16.msra.mxu0 0
  %695 = vmatprep.subr.bf16.mxu0 0
  %696 = vmatpush1.bf16.msra.mxu0 0
  %697 = vmatprep.subr.bf16.mxu0 0
  %698 = vmatpush1.bf16.msra.mxu0 0
  %699 = vmatprep.subr.bf16.mxu0 0
  %700 = vmatpush1.bf16.msra.mxu0 0
  %701 = vmatprep.subr.bf16.mxu0 0
  %702 = vmatpush1.bf16.msra.mxu0 0
  %703 = vmatprep.subr.bf16.mxu0 0
  %704 = vmatpush1.bf16.msra.mxu0 0
  %705 = vmatprep.subr.bf16.mxu0 0
  %706 = vmatpush1.bf16.msra.mxu0 0
  %707 = vmatprep.subr.bf16.mxu0 0
  %708 = vmatpush1.bf16.msra.mxu0 0
  %709 = vmatprep.subr.bf16.mxu0 0
  %710 = vmatpush1.bf16.msra.mxu0 0
  %711 = vmatprep.subr.bf16.mxu0 0
  %712 = vmatpush1.bf16.msra.mxu0 0
  %713 = vmatprep.subr.bf16.mxu0 0
  %714 = vmatpush1.bf16.msra.mxu0 0
  %715 = vmatprep.mubr.bf16.mxu0 0
  %716 = vmatmul.mubr.bf16.gmra.mrb[0].mxu0 %v232
  %v717 = vpop.f32.mrb[0].mxu0
  %v718 = vadd.f32 0.0, %v717
  %v719 = vpop.f32.mrb[0].mxu0
  %v720 = vpop.f32.mrb[0].mxu0
  %v721 = vadd.f32 0.0, %v720
  %v722 = vpop.f32.mrb[0].mxu0
  %723 = vdwg.mxu0
  %724 = vrot.lane.b32.xlu0 %v593, 64
  %v725 = vpop.permute.xlu0 %724
  %727 = vmatprep.subr.bf16.mxu0 0
  %728 = vmatpush1.bf16.msra.mxu0 %v725
  %729 = vmatprep.subr.bf16.mxu0 0
  %730 = vmatpush1.bf16.msra.mxu0 0
  %731 = vmatprep.subr.bf16.mxu0 0
  %732 = vmatpush1.bf16.msra.mxu0 0
  %733 = vmatprep.subr.bf16.mxu0 0
  %734 = vmatpush1.bf16.msra.mxu0 0
  %735 = vmatprep.subr.bf16.mxu0 0
  %736 = vmatpush1.bf16.msra.mxu0 0
  %737 = vmatprep.subr.bf16.mxu0 0
  %738 = vmatpush1.bf16.msra.mxu0 0
  %739 = vmatprep.subr.bf16.mxu0 0
  %740 = vmatpush1.bf16.msra.mxu0 0
  %741 = vmatprep.subr.bf16.mxu0 0
  %742 = vmatpush1.bf16.msra.mxu0 0
  %743 = vmatprep.subr.bf16.mxu0 0
  %744 = vmatpush1.bf16.msra.mxu0 0
  %745 = vmatprep.subr.bf16.mxu0 0
  %746 = vmatpush1.bf16.msra.mxu0 0
  %747 = vmatprep.subr.bf16.mxu0 0
  %748 = vmatpush1.bf16.msra.mxu0 0
  %749 = vmatprep.subr.bf16.mxu0 0
  %750 = vmatpush1.bf16.msra.mxu0 0
  %751 = vmatprep.subr.bf16.mxu0 0
  %752 = vmatpush1.bf16.msra.mxu0 0
  %753 = vmatprep.subr.bf16.mxu0 0
  %754 = vmatpush1.bf16.msra.mxu0 0
  %755 = vmatprep.subr.bf16.mxu0 0
  %756 = vmatpush1.bf16.msra.mxu0 0
  %757 = vmatprep.subr.bf16.mxu0 0
  %758 = vmatpush1.bf16.msra.mxu0 0
  %759 = vmatprep.mubr.bf16.mxu0 0
  %760 = vmatmul.mubr.bf16.gmra.mrb[0].mxu0 %v284
  %v761 = vpop.f32.mrb[0].mxu0
  %v762 = vadd.f32 %v718, %v761
  %v763 = vpop.f32.mrb[0].mxu0
  %v764 = vpop.f32.mrb[0].mxu0
  %v765 = vadd.f32 %v721, %v764
  %v766 = vpop.f32.mrb[0].mxu0
  %767 = vdwg.mxu0
  %770 = vrot.lane.b32.xlu0 %v762, 32
  %v771 = vpop.permute.xlu0 %770
  %772 = vrot.lane.b32.xlu0 %v765, 32
  %v773 = vpop.permute.xlu0 %772
  %778 = vrot.lane.b32.xlu0 %v543, 32
  %v779 = vpop.permute.xlu0 %778
  %780 = vrot.lane.b32.xlu0 %v544, 32
  %v781 = vpop.permute.xlu0 %780
  %v784 = vsel %vm74, %v674, %v771
  %v785 = vsel %vm74, %v677, %v773
  %v786 = vsel %vm345, %v784, %v779
  %v787 = vsel %vm345, %v785, %v781
  %v788 = vpack.c.bf16 %v787, %v786
  %v790 = vsel %vm385, %v788, 0
  %792 = vmatprep.subr.bf16.mxu0 0
  %793 = vmatpush1.bf16.msra.mxu0 %v373
  %794 = vmatprep.subr.bf16.mxu0 0
  %795 = vmatpush1.bf16.msra.mxu0 %v374
  %796 = vmatprep.subr.bf16.mxu0 0
  %797 = vmatpush1.bf16.msra.mxu0 %v375
  %798 = vmatprep.subr.bf16.mxu0 0
  %799 = vmatpush1.bf16.msra.mxu0 %v376
  %800 = vmatprep.subr.bf16.mxu0 0
  %801 = vmatpush1.bf16.msra.mxu0 %v377
  %802 = vmatprep.subr.bf16.mxu0 0
  %803 = vmatpush1.bf16.msra.mxu0 %v378
  %804 = vmatprep.subr.bf16.mxu0 0
  %805 = vmatpush1.bf16.msra.mxu0 0
  %806 = vmatprep.subr.bf16.mxu0 0
  %807 = vmatpush1.bf16.msra.mxu0 0
  %808 = vmatprep.subr.bf16.mxu0 0
  %809 = vmatpush1.bf16.msra.mxu0 0
  %810 = vmatprep.subr.bf16.mxu0 0
  %811 = vmatpush1.bf16.msra.mxu0 0
  %812 = vmatprep.subr.bf16.mxu0 0
  %813 = vmatpush1.bf16.msra.mxu0 0
  %814 = vmatprep.subr.bf16.mxu0 0
  %815 = vmatpush1.bf16.msra.mxu0 0
  %816 = vmatprep.subr.bf16.mxu0 0
  %817 = vmatpush1.bf16.msra.mxu0 0
  %818 = vmatprep.subr.bf16.mxu0 0
  %819 = vmatpush1.bf16.msra.mxu0 0
  %820 = vmatprep.subr.bf16.mxu0 0
  %821 = vmatpush1.bf16.msra.mxu0 0
  %822 = vmatprep.subr.bf16.mxu0 0
  %823 = vmatpush1.bf16.msra.mxu0 0
  %824 = vmatprep.mubr.bf16.mxu0 0
  %825 = vmatmul.mubr.bf16.gmra.mrb[0].mxu0 %v790
  %v826 = vpop.f32.mrb[0].mxu0
  %v827 = vadd.f32 %v50, %v826
  %v828 = vpop.f32.mrb[0].mxu0
  %v829 = vpop.f32.mrb[0].mxu0
  %v830 = vadd.f32 %v50, %v829
  %v831 = vpop.f32.mrb[0].mxu0
  %832 = vdwg.mxu0
  %v833 = vxor.u32 %v827, 2147483648
  %v834 = vxor.u32 %v830, 2147483648
  %v835 = vmul.f32 %v833, 1.442695
  %v836 = vpow.pop %v835
  %v837 = vmul.f32 %v834, 1.442695
  %v838 = vpow.pop %v837
  %v839 = vadd.f32 %v836, 1.0
  %v840 = vadd.f32 %v838, 1.0
  %v841 = vrcp.pop %v839
  %v842 = vmul.f32 1.0, %v841
  %v843 = vrcp.pop %v840
  %v844 = vmul.f32 1.0, %v843
  %845 = vrot.lane.b32.xlu0 %v543, 96
  %v846 = vpop.permute.xlu0 %845
  %847 = vrot.lane.b32.xlu0 %v544, 96
  %v848 = vpop.permute.xlu0 %847
  %v851 = vmul.f32 %v842, %v846
  %v852 = vmul.f32 %v844, %v848
  %855 = vrot.lane.b32.xlu0 %v851, 64
  %v856 = vpop.permute.xlu0 %855
  %857 = vrot.lane.b32.xlu0 %v852, 64
  %v858 = vpop.permute.xlu0 %857
  %v861 = vsel %vm345, %v784, %v856
  %v862 = vsel %vm345, %v785, %v858
  %v863 = vpack.c.bf16 %v862, %v861
  %v865 = vsel %vm385, %v863, 0
  %867 = vmatprep.subr.bf16.mxu0 0
  %868 = vmatpush1.bf16.msra.mxu0 %v456
  %869 = vmatprep.subr.bf16.mxu0 0
  %870 = vmatpush1.bf16.msra.mxu0 %v458
  %871 = vmatprep.subr.bf16.mxu0 0
  %872 = vmatpush1.bf16.msra.mxu0 %v460
  %873 = vmatprep.subr.bf16.mxu0 0
  %874 = vmatpush1.bf16.msra.mxu0 %v462
  %875 = vmatprep.subr.bf16.mxu0 0
  %876 = vmatpush1.bf16.msra.mxu0 %v464
  %877 = vmatprep.subr.bf16.mxu0 0
  %878 = vmatpush1.bf16.msra.mxu0 %v466
  %879 = vmatprep.subr.bf16.mxu0 0
  %880 = vmatpush1.bf16.msra.mxu0 0
  %881 = vmatprep.subr.bf16.mxu0 0
  %882 = vmatpush1.bf16.msra.mxu0 0
  %883 = vmatprep.subr.bf16.mxu0 0
  %884 = vmatpush1.bf16.msra.mxu0 0
  %885 = vmatprep.subr.bf16.mxu0 0
  %886 = vmatpush1.bf16.msra.mxu0 0
  %887 = vmatprep.subr.bf16.mxu0 0
  %888 = vmatpush1.bf16.msra.mxu0 0
  %889 = vmatprep.subr.bf16.mxu0 0
  %890 = vmatpush1.bf16.msra.mxu0 0
  %891 = vmatprep.subr.bf16.mxu0 0
  %892 = vmatpush1.bf16.msra.mxu0 0
  %893 = vmatprep.subr.bf16.mxu0 0
  %894 = vmatpush1.bf16.msra.mxu0 0
  %895 = vmatprep.subr.bf16.mxu0 0
  %896 = vmatpush1.bf16.msra.mxu0 0
  %897 = vmatprep.subr.bf16.mxu0 0
  %898 = vmatpush1.bf16.msra.mxu0 0
  %899 = vmatprep.mubr.bf16.mxu0 0
  %900 = vmatmul.mubr.bf16.gmra.mrb[0].mxu0 %v865
  %v901 = vpop.f32.mrb[0].mxu0
  %v902 = vadd.f32 %v475, %v901
  %v903 = vpop.f32.mrb[0].mxu0
  %v904 = vpop.f32.mrb[0].mxu0
  %v905 = vadd.f32 %v475, %v904
  %v906 = vpop.f32.mrb[0].mxu0
  %907 = vdwg.mxu0
  %v908 = vtanh.pop %v902
  %v909 = vtanh.pop %v905
  %v910 = vsub.f32 1.0, %v842
  %v911 = vsub.f32 1.0, %v844
  %v912 = vmul.f32 %v910, %v543
  %v913 = vmul.f32 %v911, %v544
  %916 = vrot.lane.b32.xlu0 %v908, 32
  %v917 = vpop.permute.xlu0 %916
  %918 = vrot.lane.b32.xlu0 %v909, 32
  %v919 = vpop.permute.xlu0 %918
  %v922 = vmul.f32 %v842, %v917
  %v923 = vmul.f32 %v844, %v919
  %v924 = vadd.f32 %v912, %v922
  %v925 = vadd.f32 %v913, %v923
  %v926 = vpack.c.bf16 %v925, %v924
  %928 = vrot.lane.b32.xlu0 %v926, 96
  %v929 = vpop.permute.xlu0 %928
  %v931 = vsel %vm74, %v929, 0
  %933 = vmatprep.subr.bf16.mxu0 0
  %934 = vmatpush1.bf16.msra.mxu0 %v70
  %935 = vmatprep.subr.bf16.mxu0 0
  %936 = vmatpush1.bf16.msra.mxu0 %v71
  %937 = vmatprep.subr.bf16.mxu0 0
  %938 = vmatpush1.bf16.msra.mxu0 0
  %939 = vmatprep.subr.bf16.mxu0 0
  %940 = vmatpush1.bf16.msra.mxu0 0
  %941 = vmatprep.subr.bf16.mxu0 0
  %942 = vmatpush1.bf16.msra.mxu0 0
  %943 = vmatprep.subr.bf16.mxu0 0
  %944 = vmatpush1.bf16.msra.mxu0 0
  %945 = vmatprep.subr.bf16.mxu0 0
  %946 = vmatpush1.bf16.msra.mxu0 0
  %947 = vmatprep.subr.bf16.mxu0 0
  %948 = vmatpush1.bf16.msra.mxu0 0
  %949 = vmatprep.subr.bf16.mxu0 0
  %950 = vmatpush1.bf16.msra.mxu0 0
  %951 = vmatprep.subr.bf16.mxu0 0
  %952 = vmatpush1.bf16.msra.mxu0 0
  %953 = vmatprep.subr.bf16.mxu0 0
  %954 = vmatpush1.bf16.msra.mxu0 0
  %955 = vmatprep.subr.bf16.mxu0 0
  %956 = vmatpush1.bf16.msra.mxu0 0
  %957 = vmatprep.subr.bf16.mxu0 0
  %958 = vmatpush1.bf16.msra.mxu0 0
  %959 = vmatprep.subr.bf16.mxu0 0
  %960 = vmatpush1.bf16.msra.mxu0 0
  %961 = vmatprep.subr.bf16.mxu0 0
  %962 = vmatpush1.bf16.msra.mxu0 0
  %963 = vmatprep.subr.bf16.mxu0 0
  %964 = vmatpush1.bf16.msra.mxu0 0
  %965 = vmatprep.mubr.bf16.mxu0 0
  %966 = vmatmul.mubr.bf16.gmra.mrb[0].mxu0 %v931
  %v967 = vpop.f32.mrb[0].mxu0
  %v968 = vadd.f32 %v46, %v967
  %v969 = vpop.f32.mrb[0].mxu0
  %v970 = vpop.f32.mrb[0].mxu0
  %v971 = vadd.f32 %v46, %v970
  %v972 = vpop.f32.mrb[0].mxu0
  %973 = vdwg.mxu0
  %v974 = vpack.c.bf16 %v971, %v968
  %976 = vrot.lane.b32.xlu0 %v974, 96
  %v977 = vpop.permute.xlu0 %976
  %979 = vmatprep.subr.bf16.mxu0 0
  %980 = vmatpush1.bf16.msra.mxu0 %v977
  %981 = vmatprep.subr.bf16.mxu0 0
  %982 = vmatpush1.bf16.msra.mxu0 0
  %983 = vmatprep.subr.bf16.mxu0 0
  %984 = vmatpush1.bf16.msra.mxu0 0
  %985 = vmatprep.subr.bf16.mxu0 0
  %986 = vmatpush1.bf16.msra.mxu0 0
  %987 = vmatprep.subr.bf16.mxu0 0
  %988 = vmatpush1.bf16.msra.mxu0 0
  %989 = vmatprep.subr.bf16.mxu0 0
  %990 = vmatpush1.bf16.msra.mxu0 0
  %991 = vmatprep.subr.bf16.mxu0 0
  %992 = vmatpush1.bf16.msra.mxu0 0
  %993 = vmatprep.subr.bf16.mxu0 0
  %994 = vmatpush1.bf16.msra.mxu0 0
  %995 = vmatprep.subr.bf16.mxu0 0
  %996 = vmatpush1.bf16.msra.mxu0 0
  %997 = vmatprep.subr.bf16.mxu0 0
  %998 = vmatpush1.bf16.msra.mxu0 0
  %999 = vmatprep.subr.bf16.mxu0 0
  %1000 = vmatpush1.bf16.msra.mxu0 0
  %1001 = vmatprep.subr.bf16.mxu0 0
  %1002 = vmatpush1.bf16.msra.mxu0 0
  %1003 = vmatprep.subr.bf16.mxu0 0
  %1004 = vmatpush1.bf16.msra.mxu0 0
  %1005 = vmatprep.subr.bf16.mxu0 0
  %1006 = vmatpush1.bf16.msra.mxu0 0
  %1007 = vmatprep.subr.bf16.mxu0 0
  %1008 = vmatpush1.bf16.msra.mxu0 0
  %1009 = vmatprep.subr.bf16.mxu0 0
  %1010 = vmatpush1.bf16.msra.mxu0 0
  %1011 = vmatprep.mubr.bf16.mxu0 0
  %1012 = vmatmul.mubr.bf16.gmra.mrb[0].mxu0 %v131
  %v1013 = vpop.f32.mrb[0].mxu0
  %v1014 = vadd.f32 0.0, %v1013
  %v1015 = vpop.f32.mrb[0].mxu0
  %v1016 = vpop.f32.mrb[0].mxu0
  %v1017 = vadd.f32 0.0, %v1016
  %v1018 = vpop.f32.mrb[0].mxu0
  %1019 = vdwg.mxu0
  %1020 = vmatprep.subr.bf16.mxu0 0
  %1021 = vmatpush1.bf16.msra.mxu0 %v974
  %1022 = vmatprep.subr.bf16.mxu0 0
  %1023 = vmatpush1.bf16.msra.mxu0 0
  %1024 = vmatprep.subr.bf16.mxu0 0
  %1025 = vmatpush1.bf16.msra.mxu0 0
  %1026 = vmatprep.subr.bf16.mxu0 0
  %1027 = vmatpush1.bf16.msra.mxu0 0
  %1028 = vmatprep.subr.bf16.mxu0 0
  %1029 = vmatpush1.bf16.msra.mxu0 0
  %1030 = vmatprep.subr.bf16.mxu0 0
  %1031 = vmatpush1.bf16.msra.mxu0 0
  %1032 = vmatprep.subr.bf16.mxu0 0
  %1033 = vmatpush1.bf16.msra.mxu0 0
  %1034 = vmatprep.subr.bf16.mxu0 0
  %1035 = vmatpush1.bf16.msra.mxu0 0
  %1036 = vmatprep.subr.bf16.mxu0 0
  %1037 = vmatpush1.bf16.msra.mxu0 0
  %1038 = vmatprep.subr.bf16.mxu0 0
  %1039 = vmatpush1.bf16.msra.mxu0 0
  %1040 = vmatprep.subr.bf16.mxu0 0
  %1041 = vmatpush1.bf16.msra.mxu0 0
  %1042 = vmatprep.subr.bf16.mxu0 0
  %1043 = vmatpush1.bf16.msra.mxu0 0
  %1044 = vmatprep.subr.bf16.mxu0 0
  %1045 = vmatpush1.bf16.msra.mxu0 0
  %1046 = vmatprep.subr.bf16.mxu0 0
  %1047 = vmatpush1.bf16.msra.mxu0 0
  %1048 = vmatprep.subr.bf16.mxu0 0
  %1049 = vmatpush1.bf16.msra.mxu0 0
  %1050 = vmatprep.subr.bf16.mxu0 0
  %1051 = vmatpush1.bf16.msra.mxu0 0
  %1052 = vmatprep.mubr.bf16.mxu0 0
  %1053 = vmatmul.mubr.bf16.gmra.mrb[0].mxu0 %v180
  %v1054 = vpop.f32.mrb[0].mxu0
  %v1055 = vadd.f32 %v1014, %v1054
  %v1056 = vpop.f32.mrb[0].mxu0
  %v1057 = vpop.f32.mrb[0].mxu0
  %v1058 = vadd.f32 %v1017, %v1057
  %v1059 = vpop.f32.mrb[0].mxu0
  %1060 = vdwg.mxu0
  %1061 = vrot.lane.b32.xlu0 %v974, 32
  %v1062 = vpop.permute.xlu0 %1061
  %1064 = vmatprep.subr.bf16.mxu0 0
  %1065 = vmatpush1.bf16.msra.mxu0 %v1062
  %1066 = vmatprep.subr.bf16.mxu0 0
  %1067 = vmatpush1.bf16.msra.mxu0 0
  %1068 = vmatprep.subr.bf16.mxu0 0
  %1069 = vmatpush1.bf16.msra.mxu0 0
  %1070 = vmatprep.subr.bf16.mxu0 0
  %1071 = vmatpush1.bf16.msra.mxu0 0
  %1072 = vmatprep.subr.bf16.mxu0 0
  %1073 = vmatpush1.bf16.msra.mxu0 0
  %1074 = vmatprep.subr.bf16.mxu0 0
  %1075 = vmatpush1.bf16.msra.mxu0 0
  %1076 = vmatprep.subr.bf16.mxu0 0
  %1077 = vmatpush1.bf16.msra.mxu0 0
  %1078 = vmatprep.subr.bf16.mxu0 0
  %1079 = vmatpush1.bf16.msra.mxu0 0
  %1080 = vmatprep.subr.bf16.mxu0 0
  %1081 = vmatpush1.bf16.msra.mxu0 0
  %1082 = vmatprep.subr.bf16.mxu0 0
  %1083 = vmatpush1.bf16.msra.mxu0 0
  %1084 = vmatprep.subr.bf16.mxu0 0
  %1085 = vmatpush1.bf16.msra.mxu0 0
  %1086 = vmatprep.subr.bf16.mxu0 0
  %1087 = vmatpush1.bf16.msra.mxu0 0
  %1088 = vmatprep.subr.bf16.mxu0 0
  %1089 = vmatpush1.bf16.msra.mxu0 0
  %1090 = vmatprep.subr.bf16.mxu0 0
  %1091 = vmatpush1.bf16.msra.mxu0 0
  %1092 = vmatprep.subr.bf16.mxu0 0
  %1093 = vmatpush1.bf16.msra.mxu0 0
  %1094 = vmatprep.subr.bf16.mxu0 0
  %1095 = vmatpush1.bf16.msra.mxu0 0
  %1096 = vmatprep.mubr.bf16.mxu0 0
  %1097 = vmatmul.mubr.bf16.gmra.mrb[0].mxu0 %v232
  %v1098 = vpop.f32.mrb[0].mxu0
  %v1099 = vadd.f32 0.0, %v1098
  %v1100 = vpop.f32.mrb[0].mxu0
  %v1101 = vpop.f32.mrb[0].mxu0
  %v1102 = vadd.f32 0.0, %v1101
  %v1103 = vpop.f32.mrb[0].mxu0
  %1104 = vdwg.mxu0
  %1105 = vrot.lane.b32.xlu0 %v974, 64
  %v1106 = vpop.permute.xlu0 %1105
  %1108 = vmatprep.subr.bf16.mxu0 0
  %1109 = vmatpush1.bf16.msra.mxu0 %v1106
  %1110 = vmatprep.subr.bf16.mxu0 0
  %1111 = vmatpush1.bf16.msra.mxu0 0
  %1112 = vmatprep.subr.bf16.mxu0 0
  %1113 = vmatpush1.bf16.msra.mxu0 0
  %1114 = vmatprep.subr.bf16.mxu0 0
  %1115 = vmatpush1.bf16.msra.mxu0 0
  %1116 = vmatprep.subr.bf16.mxu0 0
  %1117 = vmatpush1.bf16.msra.mxu0 0
  %1118 = vmatprep.subr.bf16.mxu0 0
  %1119 = vmatpush1.bf16.msra.mxu0 0
  %1120 = vmatprep.subr.bf16.mxu0 0
  %1121 = vmatpush1.bf16.msra.mxu0 0
  %1122 = vmatprep.subr.bf16.mxu0 0
  %1123 = vmatpush1.bf16.msra.mxu0 0
  %1124 = vmatprep.subr.bf16.mxu0 0
  %1125 = vmatpush1.bf16.msra.mxu0 0
  %1126 = vmatprep.subr.bf16.mxu0 0
  %1127 = vmatpush1.bf16.msra.mxu0 0
  %1128 = vmatprep.subr.bf16.mxu0 0
  %1129 = vmatpush1.bf16.msra.mxu0 0
  %1130 = vmatprep.subr.bf16.mxu0 0
  %1131 = vmatpush1.bf16.msra.mxu0 0
  %1132 = vmatprep.subr.bf16.mxu0 0
  %1133 = vmatpush1.bf16.msra.mxu0 0
  %1134 = vmatprep.subr.bf16.mxu0 0
  %1135 = vmatpush1.bf16.msra.mxu0 0
  %1136 = vmatprep.subr.bf16.mxu0 0
  %1137 = vmatpush1.bf16.msra.mxu0 0
  %1138 = vmatprep.subr.bf16.mxu0 0
  %1139 = vmatpush1.bf16.msra.mxu0 0
  %1140 = vmatprep.mubr.bf16.mxu0 0
  %1141 = vmatmul.mubr.bf16.gmra.mrb[0].mxu0 %v284
  %v1142 = vpop.f32.mrb[0].mxu0
  %v1143 = vadd.f32 %v1099, %v1142
  %v1144 = vpop.f32.mrb[0].mxu0
  %v1145 = vpop.f32.mrb[0].mxu0
  %v1146 = vadd.f32 %v1102, %v1145
  %v1147 = vpop.f32.mrb[0].mxu0
  %1148 = vdwg.mxu0
  %1151 = vrot.lane.b32.xlu0 %v1143, 32
  %v1152 = vpop.permute.xlu0 %1151
  %1153 = vrot.lane.b32.xlu0 %v1146, 32
  %v1154 = vpop.permute.xlu0 %1153
  %1159 = vrot.lane.b32.xlu0 %v924, 32
  %v1160 = vpop.permute.xlu0 %1159
  %1161 = vrot.lane.b32.xlu0 %v925, 32
  %v1162 = vpop.permute.xlu0 %1161
  %v1165 = vsel %vm74, %v1055, %v1152
  %v1166 = vsel %vm74, %v1058, %v1154
  %v1167 = vsel %vm345, %v1165, %v1160
  %v1168 = vsel %vm345, %v1166, %v1162
  %v1169 = vpack.c.bf16 %v1168, %v1167
  %v1171 = vsel %vm385, %v1169, 0
  %1173 = vmatprep.subr.bf16.mxu0 0
  %1174 = vmatpush1.bf16.msra.mxu0 %v373
  %1175 = vmatprep.subr.bf16.mxu0 0
  %1176 = vmatpush1.bf16.msra.mxu0 %v374
  %1177 = vmatprep.subr.bf16.mxu0 0
  %1178 = vmatpush1.bf16.msra.mxu0 %v375
  %1179 = vmatprep.subr.bf16.mxu0 0
  %1180 = vmatpush1.bf16.msra.mxu0 %v376
  %1181 = vmatprep.subr.bf16.mxu0 0
  %1182 = vmatpush1.bf16.msra.mxu0 %v377
  %1183 = vmatprep.subr.bf16.mxu0 0
  %1184 = vmatpush1.bf16.msra.mxu0 %v378
  %1185 = vmatprep.subr.bf16.mxu0 0
  %1186 = vmatpush1.bf16.msra.mxu0 0
  %1187 = vmatprep.subr.bf16.mxu0 0
  %1188 = vmatpush1.bf16.msra.mxu0 0
  %1189 = vmatprep.subr.bf16.mxu0 0
  %1190 = vmatpush1.bf16.msra.mxu0 0
  %1191 = vmatprep.subr.bf16.mxu0 0
  %1192 = vmatpush1.bf16.msra.mxu0 0
  %1193 = vmatprep.subr.bf16.mxu0 0
  %1194 = vmatpush1.bf16.msra.mxu0 0
  %1195 = vmatprep.subr.bf16.mxu0 0
  %1196 = vmatpush1.bf16.msra.mxu0 0
  %1197 = vmatprep.subr.bf16.mxu0 0
  %1198 = vmatpush1.bf16.msra.mxu0 0
  %1199 = vmatprep.subr.bf16.mxu0 0
  %1200 = vmatpush1.bf16.msra.mxu0 0
  %1201 = vmatprep.subr.bf16.mxu0 0
  %1202 = vmatpush1.bf16.msra.mxu0 0
  %1203 = vmatprep.subr.bf16.mxu0 0
  %1204 = vmatpush1.bf16.msra.mxu0 0
  %1205 = vmatprep.mubr.bf16.mxu0 0
  %1206 = vmatmul.mubr.bf16.gmra.mrb[0].mxu0 %v1171
  %v1207 = vpop.f32.mrb[0].mxu0
  %v1208 = vadd.f32 %v50, %v1207
  %v1209 = vpop.f32.mrb[0].mxu0
  %v1210 = vpop.f32.mrb[0].mxu0
  %v1211 = vadd.f32 %v50, %v1210
  %v1212 = vpop.f32.mrb[0].mxu0
  %1213 = vdwg.mxu0
  %v1214 = vxor.u32 %v1208, 2147483648
  %v1215 = vxor.u32 %v1211, 2147483648
  %v1216 = vmul.f32 %v1214, 1.442695
  %v1217 = vpow.pop %v1216
  %v1218 = vmul.f32 %v1215, 1.442695
  %v1219 = vpow.pop %v1218
  %v1220 = vadd.f32 %v1217, 1.0
  %v1221 = vadd.f32 %v1219, 1.0
  %v1222 = vrcp.pop %v1220
  %v1223 = vmul.f32 1.0, %v1222
  %v1224 = vrcp.pop %v1221
  %v1225 = vmul.f32 1.0, %v1224
  %1226 = vrot.lane.b32.xlu0 %v924, 96
  %v1227 = vpop.permute.xlu0 %1226
  %1228 = vrot.lane.b32.xlu0 %v925, 96
  %v1229 = vpop.permute.xlu0 %1228
  %v1232 = vmul.f32 %v1223, %v1227
  %v1233 = vmul.f32 %v1225, %v1229
  %1236 = vrot.lane.b32.xlu0 %v1232, 64
  %v1237 = vpop.permute.xlu0 %1236
  %1238 = vrot.lane.b32.xlu0 %v1233, 64
  %v1239 = vpop.permute.xlu0 %1238
  %v1242 = vsel %vm345, %v1165, %v1237
  %v1243 = vsel %vm345, %v1166, %v1239
  %v1244 = vpack.c.bf16 %v1243, %v1242
  %v1246 = vsel %vm385, %v1244, 0
  %1248 = vmatprep.subr.bf16.mxu0 0
  %1249 = vmatpush1.bf16.msra.mxu0 %v456
  %1250 = vmatprep.subr.bf16.mxu0 0
  %1251 = vmatpush1.bf16.msra.mxu0 %v458
  %1252 = vmatprep.subr.bf16.mxu0 0
  %1253 = vmatpush1.bf16.msra.mxu0 %v460
  %1254 = vmatprep.subr.bf16.mxu0 0
  %1255 = vmatpush1.bf16.msra.mxu0 %v462
  %1256 = vmatprep.subr.bf16.mxu0 0
  %1257 = vmatpush1.bf16.msra.mxu0 %v464
  %1258 = vmatprep.subr.bf16.mxu0 0
  %1259 = vmatpush1.bf16.msra.mxu0 %v466
  %1260 = vmatprep.subr.bf16.mxu0 0
  %1261 = vmatpush1.bf16.msra.mxu0 0
  %1262 = vmatprep.subr.bf16.mxu0 0
  %1263 = vmatpush1.bf16.msra.mxu0 0
  %1264 = vmatprep.subr.bf16.mxu0 0
  %1265 = vmatpush1.bf16.msra.mxu0 0
  %1266 = vmatprep.subr.bf16.mxu0 0
  %1267 = vmatpush1.bf16.msra.mxu0 0
  %1268 = vmatprep.subr.bf16.mxu0 0
  %1269 = vmatpush1.bf16.msra.mxu0 0
  %1270 = vmatprep.subr.bf16.mxu0 0
  %1271 = vmatpush1.bf16.msra.mxu0 0
  %1272 = vmatprep.subr.bf16.mxu0 0
  %1273 = vmatpush1.bf16.msra.mxu0 0
  %1274 = vmatprep.subr.bf16.mxu0 0
  %1275 = vmatpush1.bf16.msra.mxu0 0
  %1276 = vmatprep.subr.bf16.mxu0 0
  %1277 = vmatpush1.bf16.msra.mxu0 0
  %1278 = vmatprep.subr.bf16.mxu0 0
  %1279 = vmatpush1.bf16.msra.mxu0 0
  %1280 = vmatprep.mubr.bf16.mxu0 0
  %1281 = vmatmul.mubr.bf16.gmra.mrb[0].mxu0 %v1246
  %v1282 = vpop.f32.mrb[0].mxu0
  %v1283 = vadd.f32 %v475, %v1282
  %v1284 = vpop.f32.mrb[0].mxu0
  %v1285 = vpop.f32.mrb[0].mxu0
  %v1286 = vadd.f32 %v475, %v1285
  %v1287 = vpop.f32.mrb[0].mxu0
  %1288 = vdwg.mxu0
  %v1289 = vtanh.pop %v1283
  %v1290 = vtanh.pop %v1286
  %v1291 = vsub.f32 1.0, %v1223
  %v1292 = vsub.f32 1.0, %v1225
  %v1293 = vmul.f32 %v1291, %v924
  %v1294 = vmul.f32 %v1292, %v925
  %1297 = vrot.lane.b32.xlu0 %v1289, 32
  %v1298 = vpop.permute.xlu0 %1297
  %1299 = vrot.lane.b32.xlu0 %v1290, 32
  %v1300 = vpop.permute.xlu0 %1299
  %v1303 = vmul.f32 %v1223, %v1298
  %v1304 = vmul.f32 %v1225, %v1300
  %v1305 = vadd.f32 %v1293, %v1303
  %v1306 = vadd.f32 %v1294, %v1304
  %v1307 = vpack.c.bf16 %v1306, %v1305
  %1309 = vrot.lane.b32.xlu0 %v1307, 96
  %v1310 = vpop.permute.xlu0 %1309
  %v1312 = vsel %vm74, %v1310, 0
  %1314 = vmatprep.subr.bf16.mxu0 0
  %1315 = vmatpush1.bf16.msra.mxu0 %v70
  %1316 = vmatprep.subr.bf16.mxu0 0
  %1317 = vmatpush1.bf16.msra.mxu0 %v71
  %1318 = vmatprep.subr.bf16.mxu0 0
  %1319 = vmatpush1.bf16.msra.mxu0 0
  %1320 = vmatprep.subr.bf16.mxu0 0
  %1321 = vmatpush1.bf16.msra.mxu0 0
  %1322 = vmatprep.subr.bf16.mxu0 0
  %1323 = vmatpush1.bf16.msra.mxu0 0
  %1324 = vmatprep.subr.bf16.mxu0 0
  %1325 = vmatpush1.bf16.msra.mxu0 0
  %1326 = vmatprep.subr.bf16.mxu0 0
  %1327 = vmatpush1.bf16.msra.mxu0 0
  %1328 = vmatprep.subr.bf16.mxu0 0
  %1329 = vmatpush1.bf16.msra.mxu0 0
  %1330 = vmatprep.subr.bf16.mxu0 0
  %1331 = vmatpush1.bf16.msra.mxu0 0
  %1332 = vmatprep.subr.bf16.mxu0 0
  %1333 = vmatpush1.bf16.msra.mxu0 0
  %1334 = vmatprep.subr.bf16.mxu0 0
  %1335 = vmatpush1.bf16.msra.mxu0 0
  %1336 = vmatprep.subr.bf16.mxu0 0
  %1337 = vmatpush1.bf16.msra.mxu0 0
  %1338 = vmatprep.subr.bf16.mxu0 0
  %1339 = vmatpush1.bf16.msra.mxu0 0
  %1340 = vmatprep.subr.bf16.mxu0 0
  %1341 = vmatpush1.bf16.msra.mxu0 0
  %1342 = vmatprep.subr.bf16.mxu0 0
  %1343 = vmatpush1.bf16.msra.mxu0 0
  %1344 = vmatprep.subr.bf16.mxu0 0
  %1345 = vmatpush1.bf16.msra.mxu0 0
  %1346 = vmatprep.mubr.bf16.mxu0 0
  %1347 = vmatmul.mubr.bf16.gmra.mrb[0].mxu0 %v1312
  %v1348 = vpop.f32.mrb[0].mxu0
  %v1349 = vadd.f32 %v46, %v1348
  %v1350 = vpop.f32.mrb[0].mxu0
  %v1351 = vpop.f32.mrb[0].mxu0
  %v1352 = vadd.f32 %v46, %v1351
  %v1353 = vpop.f32.mrb[0].mxu0
  %1354 = vdwg.mxu0
  %v1355 = vpack.c.bf16 %v1352, %v1349
  %1357 = vrot.lane.b32.xlu0 %v1355, 96
  %v1358 = vpop.permute.xlu0 %1357
  %1360 = vmatprep.subr.bf16.mxu0 0
  %1361 = vmatpush1.bf16.msra.mxu0 %v1358
  %1362 = vmatprep.subr.bf16.mxu0 0
  %1363 = vmatpush1.bf16.msra.mxu0 0
  %1364 = vmatprep.subr.bf16.mxu0 0
  %1365 = vmatpush1.bf16.msra.mxu0 0
  %1366 = vmatprep.subr.bf16.mxu0 0
  %1367 = vmatpush1.bf16.msra.mxu0 0
  %1368 = vmatprep.subr.bf16.mxu0 0
  %1369 = vmatpush1.bf16.msra.mxu0 0
  %1370 = vmatprep.subr.bf16.mxu0 0
  %1371 = vmatpush1.bf16.msra.mxu0 0
  %1372 = vmatprep.subr.bf16.mxu0 0
  %1373 = vmatpush1.bf16.msra.mxu0 0
  %1374 = vmatprep.subr.bf16.mxu0 0
  %1375 = vmatpush1.bf16.msra.mxu0 0
  %1376 = vmatprep.subr.bf16.mxu0 0
  %1377 = vmatpush1.bf16.msra.mxu0 0
  %1378 = vmatprep.subr.bf16.mxu0 0
  %1379 = vmatpush1.bf16.msra.mxu0 0
  %1380 = vmatprep.subr.bf16.mxu0 0
  %1381 = vmatpush1.bf16.msra.mxu0 0
  %1382 = vmatprep.subr.bf16.mxu0 0
  %1383 = vmatpush1.bf16.msra.mxu0 0
  %1384 = vmatprep.subr.bf16.mxu0 0
  %1385 = vmatpush1.bf16.msra.mxu0 0
  %1386 = vmatprep.subr.bf16.mxu0 0
  %1387 = vmatpush1.bf16.msra.mxu0 0
  %1388 = vmatprep.subr.bf16.mxu0 0
  %1389 = vmatpush1.bf16.msra.mxu0 0
  %1390 = vmatprep.subr.bf16.mxu0 0
  %1391 = vmatpush1.bf16.msra.mxu0 0
  %1392 = vmatprep.mubr.bf16.mxu0 0
  %1393 = vmatmul.mubr.bf16.gmra.mrb[0].mxu0 %v131
  %v1394 = vpop.f32.mrb[0].mxu0
  %v1395 = vadd.f32 0.0, %v1394
  %v1396 = vpop.f32.mrb[0].mxu0
  %v1397 = vpop.f32.mrb[0].mxu0
  %v1398 = vadd.f32 0.0, %v1397
  %v1399 = vpop.f32.mrb[0].mxu0
  %1400 = vdwg.mxu0
  %1401 = vmatprep.subr.bf16.mxu0 0
  %1402 = vmatpush1.bf16.msra.mxu0 %v1355
  %1403 = vmatprep.subr.bf16.mxu0 0
  %1404 = vmatpush1.bf16.msra.mxu0 0
  %1405 = vmatprep.subr.bf16.mxu0 0
  %1406 = vmatpush1.bf16.msra.mxu0 0
  %1407 = vmatprep.subr.bf16.mxu0 0
  %1408 = vmatpush1.bf16.msra.mxu0 0
  %1409 = vmatprep.subr.bf16.mxu0 0
  %1410 = vmatpush1.bf16.msra.mxu0 0
  %1411 = vmatprep.subr.bf16.mxu0 0
  %1412 = vmatpush1.bf16.msra.mxu0 0
  %1413 = vmatprep.subr.bf16.mxu0 0
  %1414 = vmatpush1.bf16.msra.mxu0 0
  %1415 = vmatprep.subr.bf16.mxu0 0
  %1416 = vmatpush1.bf16.msra.mxu0 0
  %1417 = vmatprep.subr.bf16.mxu0 0
  %1418 = vmatpush1.bf16.msra.mxu0 0
  %1419 = vmatprep.subr.bf16.mxu0 0
  %1420 = vmatpush1.bf16.msra.mxu0 0
  %1421 = vmatprep.subr.bf16.mxu0 0
  %1422 = vmatpush1.bf16.msra.mxu0 0
  %1423 = vmatprep.subr.bf16.mxu0 0
  %1424 = vmatpush1.bf16.msra.mxu0 0
  %1425 = vmatprep.subr.bf16.mxu0 0
  %1426 = vmatpush1.bf16.msra.mxu0 0
  %1427 = vmatprep.subr.bf16.mxu0 0
  %1428 = vmatpush1.bf16.msra.mxu0 0
  %1429 = vmatprep.subr.bf16.mxu0 0
  %1430 = vmatpush1.bf16.msra.mxu0 0
  %1431 = vmatprep.subr.bf16.mxu0 0
  %1432 = vmatpush1.bf16.msra.mxu0 0
  %1433 = vmatprep.mubr.bf16.mxu0 0
  %1434 = vmatmul.mubr.bf16.gmra.mrb[0].mxu0 %v180
  %v1435 = vpop.f32.mrb[0].mxu0
  %v1436 = vadd.f32 %v1395, %v1435
  %v1437 = vpop.f32.mrb[0].mxu0
  %v1438 = vpop.f32.mrb[0].mxu0
  %v1439 = vadd.f32 %v1398, %v1438
  %v1440 = vpop.f32.mrb[0].mxu0
  %1441 = vdwg.mxu0
  %1442 = vrot.lane.b32.xlu0 %v1355, 32
  %v1443 = vpop.permute.xlu0 %1442
  %1445 = vmatprep.subr.bf16.mxu0 0
  %1446 = vmatpush1.bf16.msra.mxu0 %v1443
  %1447 = vmatprep.subr.bf16.mxu0 0
  %1448 = vmatpush1.bf16.msra.mxu0 0
  %1449 = vmatprep.subr.bf16.mxu0 0
  %1450 = vmatpush1.bf16.msra.mxu0 0
  %1451 = vmatprep.subr.bf16.mxu0 0
  %1452 = vmatpush1.bf16.msra.mxu0 0
  %1453 = vmatprep.subr.bf16.mxu0 0
  %1454 = vmatpush1.bf16.msra.mxu0 0
  %1455 = vmatprep.subr.bf16.mxu0 0
  %1456 = vmatpush1.bf16.msra.mxu0 0
  %1457 = vmatprep.subr.bf16.mxu0 0
  %1458 = vmatpush1.bf16.msra.mxu0 0
  %1459 = vmatprep.subr.bf16.mxu0 0
  %1460 = vmatpush1.bf16.msra.mxu0 0
  %1461 = vmatprep.subr.bf16.mxu0 0
  %1462 = vmatpush1.bf16.msra.mxu0 0
  %1463 = vmatprep.subr.bf16.mxu0 0
  %1464 = vmatpush1.bf16.msra.mxu0 0
  %1465 = vmatprep.subr.bf16.mxu0 0
  %1466 = vmatpush1.bf16.msra.mxu0 0
  %1467 = vmatprep.subr.bf16.mxu0 0
  %1468 = vmatpush1.bf16.msra.mxu0 0
  %1469 = vmatprep.subr.bf16.mxu0 0
  %1470 = vmatpush1.bf16.msra.mxu0 0
  %1471 = vmatprep.subr.bf16.mxu0 0
  %1472 = vmatpush1.bf16.msra.mxu0 0
  %1473 = vmatprep.subr.bf16.mxu0 0
  %1474 = vmatpush1.bf16.msra.mxu0 0
  %1475 = vmatprep.subr.bf16.mxu0 0
  %1476 = vmatpush1.bf16.msra.mxu0 0
  %1477 = vmatprep.mubr.bf16.mxu0 0
  %1478 = vmatmul.mubr.bf16.gmra.mrb[0].mxu0 %v232
  %v1479 = vpop.f32.mrb[0].mxu0
  %v1480 = vadd.f32 0.0, %v1479
  %v1481 = vpop.f32.mrb[0].mxu0
  %v1482 = vpop.f32.mrb[0].mxu0
  %v1483 = vadd.f32 0.0, %v1482
  %v1484 = vpop.f32.mrb[0].mxu0
  %1485 = vdwg.mxu0
  %1486 = vrot.lane.b32.xlu0 %v1355, 64
  %v1487 = vpop.permute.xlu0 %1486
  %1489 = vmatprep.subr.bf16.mxu0 0
  %1490 = vmatpush1.bf16.msra.mxu0 %v1487
  %1491 = vmatprep.subr.bf16.mxu0 0
  %1492 = vmatpush1.bf16.msra.mxu0 0
  %1493 = vmatprep.subr.bf16.mxu0 0
  %1494 = vmatpush1.bf16.msra.mxu0 0
  %1495 = vmatprep.subr.bf16.mxu0 0
  %1496 = vmatpush1.bf16.msra.mxu0 0
  %1497 = vmatprep.subr.bf16.mxu0 0
  %1498 = vmatpush1.bf16.msra.mxu0 0
  %1499 = vmatprep.subr.bf16.mxu0 0
  %1500 = vmatpush1.bf16.msra.mxu0 0
  %1501 = vmatprep.subr.bf16.mxu0 0
  %1502 = vmatpush1.bf16.msra.mxu0 0
  %1503 = vmatprep.subr.bf16.mxu0 0
  %1504 = vmatpush1.bf16.msra.mxu0 0
  %1505 = vmatprep.subr.bf16.mxu0 0
  %1506 = vmatpush1.bf16.msra.mxu0 0
  %1507 = vmatprep.subr.bf16.mxu0 0
  %1508 = vmatpush1.bf16.msra.mxu0 0
  %1509 = vmatprep.subr.bf16.mxu0 0
  %1510 = vmatpush1.bf16.msra.mxu0 0
  %1511 = vmatprep.subr.bf16.mxu0 0
  %1512 = vmatpush1.bf16.msra.mxu0 0
  %1513 = vmatprep.subr.bf16.mxu0 0
  %1514 = vmatpush1.bf16.msra.mxu0 0
  %1515 = vmatprep.subr.bf16.mxu0 0
  %1516 = vmatpush1.bf16.msra.mxu0 0
  %1517 = vmatprep.subr.bf16.mxu0 0
  %1518 = vmatpush1.bf16.msra.mxu0 0
  %1519 = vmatprep.subr.bf16.mxu0 0
  %1520 = vmatpush1.bf16.msra.mxu0 0
  %1521 = vmatprep.mubr.bf16.mxu0 0
  %1522 = vmatmul.mubr.bf16.gmra.mrb[0].mxu0 %v284
  %v1523 = vpop.f32.mrb[0].mxu0
  %v1524 = vadd.f32 %v1480, %v1523
  %v1525 = vpop.f32.mrb[0].mxu0
  %v1526 = vpop.f32.mrb[0].mxu0
  %v1527 = vadd.f32 %v1483, %v1526
  %v1528 = vpop.f32.mrb[0].mxu0
  %1529 = vdwg.mxu0
  %1532 = vrot.lane.b32.xlu0 %v1524, 32
  %v1533 = vpop.permute.xlu0 %1532
  %1534 = vrot.lane.b32.xlu0 %v1527, 32
  %v1535 = vpop.permute.xlu0 %1534
  %1540 = vrot.lane.b32.xlu0 %v1305, 32
  %v1541 = vpop.permute.xlu0 %1540
  %1542 = vrot.lane.b32.xlu0 %v1306, 32
  %v1543 = vpop.permute.xlu0 %1542
  %v1546 = vsel %vm74, %v1436, %v1533
  %v1547 = vsel %vm74, %v1439, %v1535
  %v1548 = vsel %vm345, %v1546, %v1541
  %v1549 = vsel %vm345, %v1547, %v1543
  %v1550 = vpack.c.bf16 %v1549, %v1548
  %v1552 = vsel %vm385, %v1550, 0
  %1554 = vmatprep.subr.bf16.mxu0 0
  %1555 = vmatpush1.bf16.msra.mxu0 %v373
  %1556 = vmatprep.subr.bf16.mxu0 0
  %1557 = vmatpush1.bf16.msra.mxu0 %v374
  %1558 = vmatprep.subr.bf16.mxu0 0
  %1559 = vmatpush1.bf16.msra.mxu0 %v375
  %1560 = vmatprep.subr.bf16.mxu0 0
  %1561 = vmatpush1.bf16.msra.mxu0 %v376
  %1562 = vmatprep.subr.bf16.mxu0 0
  %1563 = vmatpush1.bf16.msra.mxu0 %v377
  %1564 = vmatprep.subr.bf16.mxu0 0
  %1565 = vmatpush1.bf16.msra.mxu0 %v378
  %1566 = vmatprep.subr.bf16.mxu0 0
  %1567 = vmatpush1.bf16.msra.mxu0 0
  %1568 = vmatprep.subr.bf16.mxu0 0
  %1569 = vmatpush1.bf16.msra.mxu0 0
  %1570 = vmatprep.subr.bf16.mxu0 0
  %1571 = vmatpush1.bf16.msra.mxu0 0
  %1572 = vmatprep.subr.bf16.mxu0 0
  %1573 = vmatpush1.bf16.msra.mxu0 0
  %1574 = vmatprep.subr.bf16.mxu0 0
  %1575 = vmatpush1.bf16.msra.mxu0 0
  %1576 = vmatprep.subr.bf16.mxu0 0
  %1577 = vmatpush1.bf16.msra.mxu0 0
  %1578 = vmatprep.subr.bf16.mxu0 0
  %1579 = vmatpush1.bf16.msra.mxu0 0
  %1580 = vmatprep.subr.bf16.mxu0 0
  %1581 = vmatpush1.bf16.msra.mxu0 0
  %1582 = vmatprep.subr.bf16.mxu0 0
  %1583 = vmatpush1.bf16.msra.mxu0 0
  %1584 = vmatprep.subr.bf16.mxu0 0
  %1585 = vmatpush1.bf16.msra.mxu0 0
  %1586 = vmatprep.mubr.bf16.mxu0 0
  %1587 = vmatmul.mubr.bf16.gmra.mrb[0].mxu0 %v1552
  %v1588 = vpop.f32.mrb[0].mxu0
  %v1589 = vadd.f32 %v50, %v1588
  %v1590 = vpop.f32.mrb[0].mxu0
  %v1591 = vpop.f32.mrb[0].mxu0
  %v1592 = vadd.f32 %v50, %v1591
  %v1593 = vpop.f32.mrb[0].mxu0
  %1594 = vdwg.mxu0
  %v1595 = vxor.u32 %v1589, 2147483648
  %v1596 = vxor.u32 %v1592, 2147483648
  %v1597 = vmul.f32 %v1595, 1.442695
  %v1598 = vpow.pop %v1597
  %v1599 = vmul.f32 %v1596, 1.442695
  %v1600 = vpow.pop %v1599
  %v1601 = vadd.f32 %v1598, 1.0
  %v1602 = vadd.f32 %v1600, 1.0
  %v1603 = vrcp.pop %v1601
  %v1604 = vmul.f32 1.0, %v1603
  %v1605 = vrcp.pop %v1602
  %v1606 = vmul.f32 1.0, %v1605
  %1607 = vrot.lane.b32.xlu0 %v1305, 96
  %v1608 = vpop.permute.xlu0 %1607
  %1609 = vrot.lane.b32.xlu0 %v1306, 96
  %v1610 = vpop.permute.xlu0 %1609
  %v1613 = vmul.f32 %v1604, %v1608
  %v1614 = vmul.f32 %v1606, %v1610
  %1617 = vrot.lane.b32.xlu0 %v1613, 64
  %v1618 = vpop.permute.xlu0 %1617
  %1619 = vrot.lane.b32.xlu0 %v1614, 64
  %v1620 = vpop.permute.xlu0 %1619
  %v1623 = vsel %vm345, %v1546, %v1618
  %v1624 = vsel %vm345, %v1547, %v1620
  %v1625 = vpack.c.bf16 %v1624, %v1623
  %v1627 = vsel %vm385, %v1625, 0
  %1629 = vmatprep.subr.bf16.mxu0 0
  %1630 = vmatpush1.bf16.msra.mxu0 %v456
  %1631 = vmatprep.subr.bf16.mxu0 0
  %1632 = vmatpush1.bf16.msra.mxu0 %v458
  %1633 = vmatprep.subr.bf16.mxu0 0
  %1634 = vmatpush1.bf16.msra.mxu0 %v460
  %1635 = vmatprep.subr.bf16.mxu0 0
  %1636 = vmatpush1.bf16.msra.mxu0 %v462
  %1637 = vmatprep.subr.bf16.mxu0 0
  %1638 = vmatpush1.bf16.msra.mxu0 %v464
  %1639 = vmatprep.subr.bf16.mxu0 0
  %1640 = vmatpush1.bf16.msra.mxu0 %v466
  %1641 = vmatprep.subr.bf16.mxu0 0
  %1642 = vmatpush1.bf16.msra.mxu0 0
  %1643 = vmatprep.subr.bf16.mxu0 0
  %1644 = vmatpush1.bf16.msra.mxu0 0
  %1645 = vmatprep.subr.bf16.mxu0 0
  %1646 = vmatpush1.bf16.msra.mxu0 0
  %1647 = vmatprep.subr.bf16.mxu0 0
  %1648 = vmatpush1.bf16.msra.mxu0 0
  %1649 = vmatprep.subr.bf16.mxu0 0
  %1650 = vmatpush1.bf16.msra.mxu0 0
  %1651 = vmatprep.subr.bf16.mxu0 0
  %1652 = vmatpush1.bf16.msra.mxu0 0
  %1653 = vmatprep.subr.bf16.mxu0 0
  %1654 = vmatpush1.bf16.msra.mxu0 0
  %1655 = vmatprep.subr.bf16.mxu0 0
  %1656 = vmatpush1.bf16.msra.mxu0 0
  %1657 = vmatprep.subr.bf16.mxu0 0
  %1658 = vmatpush1.bf16.msra.mxu0 0
  %1659 = vmatprep.subr.bf16.mxu0 0
  %1660 = vmatpush1.bf16.msra.mxu0 0
  %1661 = vmatprep.mubr.bf16.mxu0 0
  %1662 = vmatmul.mubr.bf16.gmra.mrb[0].mxu0 %v1627
  %v1663 = vpop.f32.mrb[0].mxu0
  %v1664 = vadd.f32 %v475, %v1663
  %v1665 = vpop.f32.mrb[0].mxu0
  %v1666 = vpop.f32.mrb[0].mxu0
  %v1667 = vadd.f32 %v475, %v1666
  %v1668 = vpop.f32.mrb[0].mxu0
  %1669 = vdwg.mxu0
  %v1670 = vtanh.pop %v1664
  %v1671 = vtanh.pop %v1667
  %v1672 = vsub.f32 1.0, %v1604
  %v1673 = vsub.f32 1.0, %v1606
  %v1674 = vmul.f32 %v1672, %v1305
  %v1675 = vmul.f32 %v1673, %v1306
  %1678 = vrot.lane.b32.xlu0 %v1670, 32
  %v1679 = vpop.permute.xlu0 %1678
  %1680 = vrot.lane.b32.xlu0 %v1671, 32
  %v1681 = vpop.permute.xlu0 %1680
  %v1684 = vmul.f32 %v1604, %v1679
  %v1685 = vmul.f32 %v1606, %v1681
  %v1686 = vadd.f32 %v1674, %v1684
  %v1687 = vadd.f32 %v1675, %v1685
  %v1688 = vld [vmem:[%s1] sm:$0xff]
  %v1689 = vld [vmem:[%s1 + $0x8] sm:$0xff]
  %1692 = vrot.lane.b32.xlu0 %v1686, 96
  %v1693 = vpop.permute.xlu0 %1692
  %1694 = vrot.lane.b32.xlu0 %v1687, 96
  %v1695 = vpop.permute.xlu0 %1694
  %1700 = vrot.lane.b32.xlu0 %v1688, 32
  %v1701 = vpop.permute.xlu0 %1700
  %1702 = vrot.lane.b32.xlu0 %v1689, 32
  %v1703 = vpop.permute.xlu0 %1702
  %v1706 = vsel %vm74, %v1693, %v1701
  %v1707 = vsel %vm74, %v1695, %v1703
  %v1708 = vpack.c.bf16 %v1707, %v1706
  %v1714 = vunpack.c.l.b16 %v37
  %v1715 = vunpack.c.l.b16 %v38
  %v1716 = vunpack.c.l.b16 %v39
  %v1717 = vunpack.c.l.b16 %v40
  %v1718 = vunpack.c.l.b16 %v41
  %v1719 = vpack.c.b16 %v1715, %v1714
  %v1720 = vpack.c.b16 %v1717, %v1716
  %v1721 = vpack.c.b16 %v1718, %v1718
  %1724 = vrot.lane.b32.xlu0 %v50, 32
  %v1725 = vpop.permute.xlu0 %1724
  %vm1727 = vcmask 326656
  %v1729 = vsel %vm1727, %v1708, 0
  %vm1731 = vcmask 1043456
  %v1733 = vsel %vm1731, %v1721, 0
  %1735 = vmatprep.subr.bf16.mxu0 0
  %1736 = vmatpush1.bf16.msra.mxu0 %v1719
  %1737 = vmatprep.subr.bf16.mxu0 0
  %1738 = vmatpush1.bf16.msra.mxu0 %v1720
  %1739 = vmatprep.subr.bf16.mxu0 0
  %1740 = vmatpush1.bf16.msra.mxu0 %v1733
  %1741 = vmatprep.subr.bf16.mxu0 0
  %1742 = vmatpush1.bf16.msra.mxu0 0
  %1743 = vmatprep.subr.bf16.mxu0 0
  %1744 = vmatpush1.bf16.msra.mxu0 0
  %1745 = vmatprep.subr.bf16.mxu0 0
  %1746 = vmatpush1.bf16.msra.mxu0 0
  %1747 = vmatprep.subr.bf16.mxu0 0
  %1748 = vmatpush1.bf16.msra.mxu0 0
  %1749 = vmatprep.subr.bf16.mxu0 0
  %1750 = vmatpush1.bf16.msra.mxu0 0
  %1751 = vmatprep.subr.bf16.mxu0 0
  %1752 = vmatpush1.bf16.msra.mxu0 0
  %1753 = vmatprep.subr.bf16.mxu0 0
  %1754 = vmatpush1.bf16.msra.mxu0 0
  %1755 = vmatprep.subr.bf16.mxu0 0
  %1756 = vmatpush1.bf16.msra.mxu0 0
  %1757 = vmatprep.subr.bf16.mxu0 0
  %1758 = vmatpush1.bf16.msra.mxu0 0
  %1759 = vmatprep.subr.bf16.mxu0 0
  %1760 = vmatpush1.bf16.msra.mxu0 0
  %1761 = vmatprep.subr.bf16.mxu0 0
  %1762 = vmatpush1.bf16.msra.mxu0 0
  %1763 = vmatprep.subr.bf16.mxu0 0
  %1764 = vmatpush1.bf16.msra.mxu0 0
  %1765 = vmatprep.subr.bf16.mxu0 0
  %1766 = vmatpush1.bf16.msra.mxu0 0
  %1767 = vmatprep.mubr.bf16.mxu0 0
  %1768 = vmatmul.mubr.bf16.gmra.mrb[0].mxu0 %v1729
  %v1769 = vpop.f32.mrb[0].mxu0
  %v1770 = vadd.f32 %v1725, %v1769
  %v1771 = vpop.f32.mrb[0].mxu0
  %v1772 = vpop.f32.mrb[0].mxu0
  %v1773 = vadd.f32 %v1725, %v1772
  %v1774 = vpop.f32.mrb[0].mxu0
  %1775 = vdwg.mxu0
  %v1776 = vtanh.pop %v1770
  %v1777 = vtanh.pop %v1773
  %v1778 = vpack.c.bf16 %v1777, %v1776
  %v1779 = vlaneseq
  %v1780 = vshrl.u32 %v1779, 7
  %v1781 = vsub.s32 2, %v1780
  %v1782 = vrot.slane %v42, %v1781
  %1783 = vrot.lane.b32.xlu0 %v1719, 96
  %v1784 = vpop.permute.xlu0 %1783
  %1785 = vrot.lane.b32.xlu0 %v1720, 96
  %v1786 = vpop.permute.xlu0 %1785
  %v1790 = vsel %vm74, %v1778, 0
  %1792 = vmatprep.subr.bf16.mxu0 0
  %1793 = vmatpush1.bf16.msra.mxu0 %v1784
  %1794 = vmatprep.subr.bf16.mxu0 0
  %1795 = vmatpush1.bf16.msra.mxu0 %v1786
  %1796 = vmatprep.subr.bf16.mxu0 0
  %1797 = vmatpush1.bf16.msra.mxu0 0
  %1798 = vmatprep.subr.bf16.mxu0 0
  %1799 = vmatpush1.bf16.msra.mxu0 0
  %1800 = vmatprep.subr.bf16.mxu0 0
  %1801 = vmatpush1.bf16.msra.mxu0 0
  %1802 = vmatprep.subr.bf16.mxu0 0
  %1803 = vmatpush1.bf16.msra.mxu0 0
  %1804 = vmatprep.subr.bf16.mxu0 0
  %1805 = vmatpush1.bf16.msra.mxu0 0
  %1806 = vmatprep.subr.bf16.mxu0 0
  %1807 = vmatpush1.bf16.msra.mxu0 0
  %1808 = vmatprep.subr.bf16.mxu0 0
  %1809 = vmatpush1.bf16.msra.mxu0 0
  %1810 = vmatprep.subr.bf16.mxu0 0
  %1811 = vmatpush1.bf16.msra.mxu0 0
  %1812 = vmatprep.subr.bf16.mxu0 0
  %1813 = vmatpush1.bf16.msra.mxu0 0
  %1814 = vmatprep.subr.bf16.mxu0 0
  %1815 = vmatpush1.bf16.msra.mxu0 0
  %1816 = vmatprep.subr.bf16.mxu0 0
  %1817 = vmatpush1.bf16.msra.mxu0 0
  %1818 = vmatprep.subr.bf16.mxu0 0
  %1819 = vmatpush1.bf16.msra.mxu0 0
  %1820 = vmatprep.subr.bf16.mxu0 0
  %1821 = vmatpush1.bf16.msra.mxu0 0
  %1822 = vmatprep.subr.bf16.mxu0 0
  %1823 = vmatpush1.bf16.msra.mxu0 0
  %1824 = vmatprep.mubr.bf16.mxu0 0
  %1825 = vmatmul.mubr.bf16.gmra.mrb[0].mxu0 %v1790
  %v1826 = vpop.f32.mrb[0].mxu0
  %v1827 = vadd.f32 %v1782, %v1826
  %v1828 = vpop.f32.mrb[0].mxu0
  %v1829 = vpop.f32.mrb[0].mxu0
  %v1830 = vadd.f32 %v1782, %v1829
  %v1831 = vpop.f32.mrb[0].mxu0
  %1832 = vdwg.mxu0
  %vm1833 = vcmask 7168
  %1834 = vst.msk [vmem:[%s5] sm:$0xff] %vm1833, %v1827
  %1835 = vst.msk [vmem:[%s5 + $0x8] sm:$0xff] %vm1833, %v1830
  // Predicated region
  $region22: #{forward.1} parent=0 // pred_check
    _
  $region23: #{forward.1} parent=0 // pred_check_branch
    %1837 = sbr.rel (0) target = $region25
  $region24: #{forward.1} parent=0 // pred_region
    _
  $region25: #{forward.1} parent=0 // pred_fallthru
    _
  // Predicated region
  $region26: #{forward.1} parent=0 // pred_check
    _
  $region27: #{forward.1} parent=0 // pred_check_branch
    %1839 = sbr.rel (0) target = $region29
  $region28: #{forward.1} parent=0 // pred_region
    _
  $region29: #{forward.1} parent=0 // pred_fallthru
    _

</llo_original>
